<compile_context>
chip_gen: v7x
topology: tpu7x:2x2x1
jax: 0.10.0
libtpu: 0.0.40
codegen_flags: <defaults>
</compile_context>

<pallas_src>
import functools

import jax
import jax.numpy as jnp
from jax import lax
from jax.experimental import pallas as pl
from jax.experimental.pallas import tpu as pltpu


# ----------------------------------------------------------------------------
# Pallas kernel: full bidirectional LSTM + fused direction sum, one invocation.
# ----------------------------------------------------------------------------
def _bilstm_kernel(T, B, H, lane_aligned_gates, hoist_whh, unroll,
                   x_ref,
                   wih_ref, b_ref,           # fused (I, 8H) / (1, 8H)
                   whh_f_ref, whh_b_ref,     # (H, 4H) each, gate order [i,f,o,g]
                   h0_ref, c0_ref,
                   out_ref, hn_ref, cn_ref,
                   gx_s, out_b_s):
    # ---- Pre-pass: ONE fused input projection for BOTH directions and ALL
    # time steps (off the serial critical path).  (T*B, I) x (I, 8H) on MXU.
    gx_s[...] = (jnp.dot(x_ref[...], wih_ref[...],
                         preferred_element_type=jnp.float32) + b_ref[...])

    # Recurrent weights: hoist into vregs only if they comfortably fit
    # (small H); otherwise re-load from VMEM inside the cell each step.
    whh_f = whh_f_ref[...] if hoist_whh else None
    whh_b = whh_b_ref[...] if hoist_whh else None

    def cell(g_pre, h, c, whh_ref, whh_val):
        w = whh_val if whh_val is not None else whh_ref[...]
        # Only the recurrent matmul remains on the serial path (bf16 MXU,
        # f32 accumulation).
        g = g_pre + jnp.dot(h.astype(jnp.bfloat16), w,
                            preferred_element_type=jnp.float32)
        if lane_aligned_gates:
            # Gate order [i, f, o, g]: sigmoid on the leading 3H, tanh on the
            # trailing H — 5H transcendentals per step instead of 9H.
            sg = jax.nn.sigmoid(g[:, :3 * H])
            gg = jnp.tanh(g[:, 3 * H:])
        else:
            # H < 128: keep full-width activations (EUP otherwise idle) so the
            # lane-misaligned gate slices don't feed sigmoid/tanh directly.
            sg = jax.nn.sigmoid(g)
            gg = jnp.tanh(g)[:, 3 * H:4 * H]
        i = sg[:, 0:H]
        f = sg[:, H:2 * H]
        o = sg[:, 2 * H:3 * H]
        c_new = f * c + i * gg
        h_new = o * jnp.tanh(c_new)
        return h_new, c_new

    def body(t, carry):
        h_f, c_f, h_b, c_b = carry
        fo = pl.multiple_of(t * B, B)              # forward row offset
        bo = pl.multiple_of((T - 1 - t) * B, B)    # backward row offset
        h_f, c_f = cell(gx_s[pl.ds(fo, B), 0:4 * H], h_f, c_f, whh_f_ref, whh_f)
        h_b, c_b = cell(gx_s[pl.ds(bo, B), 4 * H:8 * H], h_b, c_b, whh_b_ref, whh_b)
        # Plain stores (no per-step read-modify-write, no aliasing).
        out_ref[pl.ds(fo, B), :] = h_f
        out_b_s[pl.ds(bo, B), :] = h_b
        return (h_f, c_f, h_b, c_b)

    # h/c state carried in vregs (no VMEM round trip per step).
    h_f, c_f, h_b, c_b = lax.fori_loop(
        0, T, body,
        (h0_ref[0], c0_ref[0], h0_ref[1], c0_ref[1]),
        unroll=unroll)

    # Fused fwd+bwd direction sum: one bulk, streaming pass off the serial path.
    out_ref[...] = out_ref[...] + out_b_s[...]

    hn_ref[0] = h_f
    hn_ref[1] = h_b
    cn_ref[0] = c_f
    cn_ref[1] = c_b


# ----------------------------------------------------------------------------
# Wrapper
# ----------------------------------------------------------------------------
def _vmem_limit_bytes():
    # Per-generation scoped-VMEM limit: ~3/4 of physical VMEM, capped at 100 MiB.
    try:
        cap = int(getattr(pltpu.get_tpu_info(), "vmem_capacity_bytes",
                          64 * 1024 * 1024))
    except Exception:
        cap = 64 * 1024 * 1024
    return int(max(32 * 1024 * 1024, min(cap * 3 // 4, 100 * 1024 * 1024)))


def bilstm_pallas(x, params, h0, c0):
    """x: (T, B, I) f32.  Returns (out_sum (T,B,H) f32, hn (2,B,H), cn (2,B,H))."""
    T, B, I = x.shape
    H = h0.shape[-1]

    # Pad batch to a multiple of 8 (f32 sublane) so per-step slices are aligned.
    Bp = ((B + 7) // 8) * 8
    if Bp != B:
        pad = [(0, 0), (0, Bp - B), (0, 0)]
        x = jnp.pad(x, pad)
        h0 = jnp.pad(h0, pad)
        c0 = jnp.pad(c0, pad)

    x2d = x.reshape(T * Bp, I).astype(jnp.bfloat16)   # half the input DMA

    lane_aligned_gates = (H % 128 == 0)
    # Hoist W_hh into vregs only when both directions fit in ~16 vregs total.
    hoist_whh = (2 * H * 4 * H * 2) <= 64 * 1024
    # Unroll sized to live (B,4H) gate-temporary footprint (target <= 32 vregs).
    per_step_live_vregs = 2 * max(1, -(-(Bp * 4 * H) // 1024))
    unroll = int(max(1, min(T, 8, 32 // per_step_live_vregs)))

    kernel = functools.partial(_bilstm_kernel, T, Bp, H,
                               lane_aligned_gates, hoist_whh, unroll)
    out2d, hn, cn = pl.pallas_call(
        kernel,
        out_shape=(jax.ShapeDtypeStruct((T * Bp, H), jnp.float32),
                   jax.ShapeDtypeStruct((2, Bp, H), jnp.float32),
                   jax.ShapeDtypeStruct((2, Bp, H), jnp.float32)),
        scratch_shapes=[pltpu.VMEM((T * Bp, 8 * H), jnp.float32),   # fused gx
                        pltpu.VMEM((T * Bp, H), jnp.float32)],      # bwd hidden
        compiler_params=pltpu.CompilerParams(
            vmem_limit_bytes=_vmem_limit_bytes()),
    )(x2d,
      params["wih"], params["b"],
      params["whh_f"], params["whh_b"],
      h0, c0)

    out = out2d.reshape(T, Bp, H)
    if Bp != B:
        out = out[:, :B]
        hn = hn[:, :B]
        cn = cn[:, :B]
    return out, hn, cn


class EncoderRNNPallas:
    def __init__(self, input_size, hidden_size, num_layers=1, batch_size=32,
                 bidirectional=True, key=None):
        # TODO(synk): num_layers > 1 not implemented (module default is 1).
        assert num_layers == 1
        # forward()'s slice outputs[:, :, H:] is only non-empty when bidirectional.
        assert bidirectional
        if key is None:
            key = jax.random.PRNGKey(0)
        self.input_size = input_size
        self.hidden_size = hidden_size
        self.num_layers = num_layers
        self.num_directions = 2

        H, I = hidden_size, input_size
        k = 1.0 / (H ** 0.5)
        keys = jax.random.split(key, 10)

        def u(kk, shape):
            return jax.random.uniform(kk, shape, jnp.float32, -k, k)

        def reorder(w):
            # PyTorch gate order along 4H is [i, f, g, o]; repack as [i, f, o, g]
            # so sigmoid covers a contiguous leading 3H block.
            return jnp.concatenate(
                [w[0:H], w[H:2 * H], w[3 * H:4 * H], w[2 * H:3 * H]], axis=0)

        wih_t, whh_t, b_t = [], [], []
        for d in range(2):                          # forward / reverse direction
            wih = u(keys[4 * d + 0], (4 * H, I))    # PyTorch weight_ih_l0[_reverse]
            whh = u(keys[4 * d + 1], (4 * H, H))    # PyTorch weight_hh_l0[_reverse]
            bih = u(keys[4 * d + 2], (4 * H,))
            bhh = u(keys[4 * d + 3], (4 * H,))
            wih_t.append(jnp.asarray(reorder(wih).T, jnp.bfloat16))   # (I, 4H)
            whh_t.append(jnp.asarray(reorder(whh).T, jnp.bfloat16))   # (H, 4H)
            b_t.append(reorder((bih + bhh)[:, None])[:, 0].astype(jnp.float32))

        self.params = {
            # Fused input-projection weight / bias for BOTH directions.
            "wih": jnp.concatenate(wih_t, axis=1),                  # (I, 8H) bf16
            "b": jnp.concatenate(b_t).reshape(1, 8 * H),            # (1, 8H) f32
            "whh_f": whh_t[0],                                      # (H, 4H) bf16
            "whh_b": whh_t[1],                                      # (H, 4H) bf16
        }

        nd = self.num_layers * self.num_directions
        self.c0 = jax.random.normal(keys[8], (nd, batch_size, H), jnp.float32)
        self.h0 = jax.random.normal(keys[9], (nd, batch_size, H), jnp.float32)

    def forward(self, inputs):
        # PyTorch module passes initial_state=(c0, h0) while nn.LSTM expects
        # (h_0, c_0) -> effective h_0 := self.c0 and c_0 := self.h0.
        h0_eff, c0_eff = self.c0, self.h0
        # TODO(synk): pack_padded_sequence / pad_packed_sequence not honored;
        # all sequences assumed full length T.
        outputs, hn, cn = bilstm_pallas(inputs, self.params, h0_eff, c0_eff)
        return outputs, (hn, cn)


# ----------------------------------------------------------------------------
# Pure-JAX reference (lax.scan) with identical bf16-matmul / f32-accumulate
# math and the same [i, f, o, g] gate packing as the kernel weights.
# ----------------------------------------------------------------------------
def _ref_lstm(x, wih, whh, b, h0, c0, H):
    def step(carry, xt):
        h, c = carry
        g = (jnp.dot(xt.astype(jnp.bfloat16), wih, preferred_element_type=jnp.float32)
             + jnp.dot(h.astype(jnp.bfloat16), whh, preferred_element_type=jnp.float32)
             + b)
        i = jax.nn.sigmoid(g[:, 0:H])
        f = jax.nn.sigmoid(g[:, H:2 * H])
        o = jax.nn.sigmoid(g[:, 2 * H:3 * H])
        gg = jnp.tanh(g[:, 3 * H:4 * H])
        c = f * c + i * gg
        h = o * jnp.tanh(c)
        return (h, c), h
    (hT, cT), hs = lax.scan(step, (h0, c0), x)
    return hs, hT, cT


if __name__ == "__main__":
    T, B, I, H = 8, 8, 16, 32
    key = jax.random.PRNGKey(0)

    enc = EncoderRNNPallas(I, H, num_layers=1, batch_size=B,
                           bidirectional=True, key=key)
    x = jax.random.normal(jax.random.fold_in(key, 99), (T, B, I), dtype=jnp.float32)

    outputs, (hn, cn) = enc.forward(x)
    jax.block_until_ready((outputs, hn, cn))

    # Reference (slice the fused weights back per direction).
    p = enc.params
    wih_f, wih_b = p["wih"][:, :4 * H], p["wih"][:, 4 * H:]
    b_f, b_b = p["b"][:, :4 * H], p["b"][:, 4 * H:]
    h0_eff, c0_eff = enc.c0, enc.h0
    hs_f, hTf, cTf = _ref_lstm(x, wih_f, p["whh_f"], b_f, h0_eff[0], c0_eff[0], H)
    hs_b, hTb, cTb = _ref_lstm(x[::-1], wih_b, p["whh_b"], b_b, h0_eff[1], c0_eff[1], H)
    ref_out = hs_f + hs_b[::-1]
    ref_hn = jnp.stack([hTf, hTb])
    ref_cn = jnp.stack([cTf, cTb])

    assert outputs.shape == (T, B, H)
    assert hn.shape == (2, B, H) and cn.shape == (2, B, H)
    assert jnp.allclose(outputs, ref_out, atol=1e-2, rtol=1e-2)
    assert jnp.allclose(hn, ref_hn, atol=1e-2, rtol=1e-2)
    assert jnp.allclose(cn, ref_cn, atol=1e-2, rtol=1e-2)

    print("KERNEL_OK")
</pallas_src>

<mosaic_0001>
module attributes {stable_mosaic.version = 11 : i64} {
  func.func @_bilstm_kernel(%arg0: memref<64x16xbf16, #tpu.memory_space<vmem>>, %arg1: memref<16x256xbf16, #tpu.memory_space<vmem>>, %arg2: memref<1x256xf32, #tpu.memory_space<vmem>>, %arg3: memref<32x128xbf16, #tpu.memory_space<vmem>>, %arg4: memref<32x128xbf16, #tpu.memory_space<vmem>>, %arg5: memref<2x8x32xf32, #tpu.memory_space<vmem>>, %arg6: memref<2x8x32xf32, #tpu.memory_space<vmem>>, %arg7: memref<64x32xf32, #tpu.memory_space<vmem>>, %arg8: memref<2x8x32xf32, #tpu.memory_space<vmem>>, %arg9: memref<2x8x32xf32, #tpu.memory_space<vmem>>, %arg10: memref<64x256xf32, #tpu.memory_space<vmem>>, %arg11: memref<64x32xf32, #tpu.memory_space<vmem>>) attributes {dimension_semantics = [], scalar_prefetch = 0 : i64, scratch_operands = 2 : i64, tpu.core_type = #tpu.core_type<tc>} {
    %c0 = arith.constant 0 : index
    %c0_0 = arith.constant 0 : index
    %0 = vector.load %arg0[%c0, %c0_0] : memref<64x16xbf16, #tpu.memory_space<vmem>>, vector<64x16xbf16>
    %c0_1 = arith.constant 0 : index
    %c0_2 = arith.constant 0 : index
    %1 = vector.load %arg1[%c0_1, %c0_2] : memref<16x256xbf16, #tpu.memory_space<vmem>>, vector<16x256xbf16>
    %cst = arith.constant dense<0.000000e+00> : vector<64x256xf32>
    %2 = tpu.matmul %0, %1, %cst {dimension_numbers = #tpu.dot_dimension_numbers<[1], [0], [0], [1], [0, 0, 1, 1], [], []>} : vector<64x16xbf16>, vector<16x256xbf16>, vector<64x256xf32> -> vector<64x256xf32>
    %c0_3 = arith.constant 0 : index
    %c0_4 = arith.constant 0 : index
    %3 = vector.load %arg2[%c0_3, %c0_4] : memref<1x256xf32, #tpu.memory_space<vmem>>, vector<1x256xf32>
    %4 = vector.broadcast %3 : vector<1x256xf32> to vector<64x256xf32>
    %5 = arith.addf %2, %4 : vector<64x256xf32>
    %c0_5 = arith.constant 0 : index
    %c0_6 = arith.constant 0 : index
    %6 = vector.load %arg10[%c0_5, %c0_6] : memref<64x256xf32, #tpu.memory_space<vmem>>, vector<64x256xf32>
    tpu.vector_store %arg10[%c0_5, %c0_6], %5 {strides = array<i32>} : memref<64x256xf32, #tpu.memory_space<vmem>>, vector<64x256xf32>,
    %c0_7 = arith.constant 0 : index
    %c0_8 = arith.constant 0 : index
    %7 = vector.load %arg3[%c0_7, %c0_8] : memref<32x128xbf16, #tpu.memory_space<vmem>>, vector<32x128xbf16>
    %c0_9 = arith.constant 0 : index
    %c0_10 = arith.constant 0 : index
    %8 = vector.load %arg4[%c0_9, %c0_10] : memref<32x128xbf16, #tpu.memory_space<vmem>>, vector<32x128xbf16>
    %c0_11 = arith.constant 0 : index
    %c0_12 = arith.constant 0 : index
    %c0_13 = arith.constant 0 : index
    %9 = vector.load %arg5[%c0_11, %c0_12, %c0_13] : memref<2x8x32xf32, #tpu.memory_space<vmem>>, vector<1x8x32xf32>
    %10 = vector.shape_cast %9 : vector<1x8x32xf32> to vector<8x32xf32>
    %c0_14 = arith.constant 0 : index
    %c0_15 = arith.constant 0 : index
    %c0_16 = arith.constant 0 : index
    %11 = vector.load %arg6[%c0_14, %c0_15, %c0_16] : memref<2x8x32xf32, #tpu.memory_space<vmem>>, vector<1x8x32xf32>
    %12 = vector.shape_cast %11 : vector<1x8x32xf32> to vector<8x32xf32>
    %c1 = arith.constant 1 : index
    %c0_17 = arith.constant 0 : index
    %c0_18 = arith.constant 0 : index
    %13 = vector.load %arg5[%c1, %c0_17, %c0_18] : memref<2x8x32xf32, #tpu.memory_space<vmem>>, vector<1x8x32xf32>
    %14 = vector.shape_cast %13 : vector<1x8x32xf32> to vector<8x32xf32>
    %c1_19 = arith.constant 1 : index
    %c0_20 = arith.constant 0 : index
    %c0_21 = arith.constant 0 : index
    %15 = vector.load %arg6[%c1_19, %c0_20, %c0_21] : memref<2x8x32xf32, #tpu.memory_space<vmem>>, vector<1x8x32xf32>
    %16 = vector.shape_cast %15 : vector<1x8x32xf32> to vector<8x32xf32>
    %c0_i32 = arith.constant 0 : i32
    %c8_i32 = arith.constant 8 : i32
    %17 = arith.muli %c0_i32, %c8_i32 : i32
    %18 = tpu.assume_multiple %17, 8 : i32
    %c7_i32 = arith.constant 7 : i32
    %19 = arith.subi %c7_i32, %c0_i32 : i32
    %c8_i32_22 = arith.constant 8 : i32
    %20 = arith.muli %19, %c8_i32_22 : i32
    %21 = tpu.assume_multiple %20, 8 : i32
    %22 = arith.index_cast %18 : i32 to index
    %c0_23 = arith.constant 0 : index
    %23 = vector.load %arg10[%22, %c0_23] : memref<64x256xf32, #tpu.memory_space<vmem>>, vector<8x128xf32>
    %24 = arith.truncf %10 : vector<8x32xf32> to vector<8x32xbf16>
    %cst_24 = arith.constant dense<0.000000e+00> : vector<8x128xf32>
    %25 = tpu.matmul %24, %7, %cst_24 {dimension_numbers = #tpu.dot_dimension_numbers<[1], [0], [0], [1], [0, 0, 1, 1], [], []>} : vector<8x32xbf16>, vector<32x128xbf16>, vector<8x128xf32> -> vector<8x128xf32>
    %26 = arith.addf %23, %25 : vector<8x128xf32>
    %27 = arith.negf %26 : vector<8x128xf32>
    %28 = math.exp %27 : vector<8x128xf32>
    %cst_25 = arith.constant 1.000000e+00 : f32
    %29 = vector.broadcast %cst_25 : f32 to vector<8x128xf32>
    %30 = arith.addf %29, %28 : vector<8x128xf32>
    %31 = arith.divf %29, %30 : vector<8x128xf32>
    %32 = math.tanh %26 : vector<8x128xf32>
    %33 = vector.extract_strided_slice %32 {offsets = [0, 96], sizes = [8, 32], strides = [1, 1]} : vector<8x128xf32> to vector<8x32xf32>
    %34 = vector.extract_strided_slice %31 {offsets = [0, 0], sizes = [8, 32], strides = [1, 1]} : vector<8x128xf32> to vector<8x32xf32>
    %35 = vector.extract_strided_slice %31 {offsets = [0, 32], sizes = [8, 32], strides = [1, 1]} : vector<8x128xf32> to vector<8x32xf32>
    %36 = vector.extract_strided_slice %31 {offsets = [0, 64], sizes = [8, 32], strides = [1, 1]} : vector<8x128xf32> to vector<8x32xf32>
    %37 = arith.mulf %35, %12 : vector<8x32xf32>
    %38 = arith.mulf %34, %33 : vector<8x32xf32>
    %39 = arith.addf %37, %38 : vector<8x32xf32>
    %40 = math.tanh %39 : vector<8x32xf32>
    %41 = arith.mulf %36, %40 : vector<8x32xf32>
    %42 = arith.index_cast %21 : i32 to index
    %c128 = arith.constant 128 : index
    %43 = vector.load %arg10[%42, %c128] : memref<64x256xf32, #tpu.memory_space<vmem>>, vector<8x128xf32>
    %44 = arith.truncf %14 : vector<8x32xf32> to vector<8x32xbf16>
    %cst_26 = arith.constant dense<0.000000e+00> : vector<8x128xf32>
    %45 = tpu.matmul %44, %8, %cst_26 {dimension_numbers = #tpu.dot_dimension_numbers<[1], [0], [0], [1], [0, 0, 1, 1], [], []>} : vector<8x32xbf16>, vector<32x128xbf16>, vector<8x128xf32> -> vector<8x128xf32>
    %46 = arith.addf %43, %45 : vector<8x128xf32>
    %47 = arith.negf %46 : vector<8x128xf32>
    %48 = math.exp %47 : vector<8x128xf32>
    %cst_27 = arith.constant 1.000000e+00 : f32
    %49 = vector.broadcast %cst_27 : f32 to vector<8x128xf32>
    %50 = arith.addf %49, %48 : vector<8x128xf32>
    %51 = arith.divf %49, %50 : vector<8x128xf32>
    %52 = math.tanh %46 : vector<8x128xf32>
    %53 = vector.extract_strided_slice %52 {offsets = [0, 96], sizes = [8, 32], strides = [1, 1]} : vector<8x128xf32> to vector<8x32xf32>
    %54 = vector.extract_strided_slice %51 {offsets = [0, 0], sizes = [8, 32], strides = [1, 1]} : vector<8x128xf32> to vector<8x32xf32>
    %55 = vector.extract_strided_slice %51 {offsets = [0, 32], sizes = [8, 32], strides = [1, 1]} : vector<8x128xf32> to vector<8x32xf32>
    %56 = vector.extract_strided_slice %51 {offsets = [0, 64], sizes = [8, 32], strides = [1, 1]} : vector<8x128xf32> to vector<8x32xf32>
    %57 = arith.mulf %55, %16 : vector<8x32xf32>
    %58 = arith.mulf %54, %53 : vector<8x32xf32>
    %59 = arith.addf %57, %58 : vector<8x32xf32>
    %60 = math.tanh %59 : vector<8x32xf32>
    %61 = arith.mulf %56, %60 : vector<8x32xf32>
    %62 = arith.index_cast %18 : i32 to index
    %c0_28 = arith.constant 0 : index
    %63 = vector.load %arg7[%62, %c0_28] : memref<64x32xf32, #tpu.memory_space<vmem>>, vector<8x32xf32>
    tpu.vector_store %arg7[%62, %c0_28], %41 {strides = array<i32>} : memref<64x32xf32, #tpu.memory_space<vmem>>, vector<8x32xf32>,
    %64 = arith.index_cast %21 : i32 to index
    %c0_29 = arith.constant 0 : index
    %65 = vector.load %arg11[%64, %c0_29] : memref<64x32xf32, #tpu.memory_space<vmem>>, vector<8x32xf32>
    tpu.vector_store %arg11[%64, %c0_29], %61 {strides = array<i32>} : memref<64x32xf32, #tpu.memory_space<vmem>>, vector<8x32xf32>,
    %c1_i32 = arith.constant 1 : i32
    %c8_i32_30 = arith.constant 8 : i32
    %66 = arith.muli %c1_i32, %c8_i32_30 : i32
    %67 = tpu.assume_multiple %66, 8 : i32
    %c7_i32_31 = arith.constant 7 : i32
    %68 = arith.subi %c7_i32_31, %c1_i32 : i32
    %c8_i32_32 = arith.constant 8 : i32
    %69 = arith.muli %68, %c8_i32_32 : i32
    %70 = tpu.assume_multiple %69, 8 : i32
    %71 = arith.index_cast %67 : i32 to index
    %c0_33 = arith.constant 0 : index
    %72 = vector.load %arg10[%71, %c0_33] : memref<64x256xf32, #tpu.memory_space<vmem>>, vector<8x128xf32>
    %73 = arith.truncf %41 : vector<8x32xf32> to vector<8x32xbf16>
    %cst_34 = arith.constant dense<0.000000e+00> : vector<8x128xf32>
    %74 = tpu.matmul %73, %7, %cst_34 {dimension_numbers = #tpu.dot_dimension_numbers<[1], [0], [0], [1], [0, 0, 1, 1], [], []>} : vector<8x32xbf16>, vector<32x128xbf16>, vector<8x128xf32> -> vector<8x128xf32>
    %75 = arith.addf %72, %74 : vector<8x128xf32>
    %76 = arith.negf %75 : vector<8x128xf32>
    %77 = math.exp %76 : vector<8x128xf32>
    %cst_35 = arith.constant 1.000000e+00 : f32
    %78 = vector.broadcast %cst_35 : f32 to vector<8x128xf32>
    %79 = arith.addf %78, %77 : vector<8x128xf32>
    %80 = arith.divf %78, %79 : vector<8x128xf32>
    %81 = math.tanh %75 : vector<8x128xf32>
    %82 = vector.extract_strided_slice %81 {offsets = [0, 96], sizes = [8, 32], strides = [1, 1]} : vector<8x128xf32> to vector<8x32xf32>
    %83 = vector.extract_strided_slice %80 {offsets = [0, 0], sizes = [8, 32], strides = [1, 1]} : vector<8x128xf32> to vector<8x32xf32>
    %84 = vector.extract_strided_slice %80 {offsets = [0, 32], sizes = [8, 32], strides = [1, 1]} : vector<8x128xf32> to vector<8x32xf32>
    %85 = vector.extract_strided_slice %80 {offsets = [0, 64], sizes = [8, 32], strides = [1, 1]} : vector<8x128xf32> to vector<8x32xf32>
    %86 = arith.mulf %84, %39 : vector<8x32xf32>
    %87 = arith.mulf %83, %82 : vector<8x32xf32>
    %88 = arith.addf %86, %87 : vector<8x32xf32>
    %89 = math.tanh %88 : vector<8x32xf32>
    %90 = arith.mulf %85, %89 : vector<8x32xf32>
    %91 = arith.index_cast %70 : i32 to index
    %c128_36 = arith.constant 128 : index
    %92 = vector.load %arg10[%91, %c128_36] : memref<64x256xf32, #tpu.memory_space<vmem>>, vector<8x128xf32>
    %93 = arith.truncf %61 : vector<8x32xf32> to vector<8x32xbf16>
    %cst_37 = arith.constant dense<0.000000e+00> : vector<8x128xf32>
    %94 = tpu.matmul %93, %8, %cst_37 {dimension_numbers = #tpu.dot_dimension_numbers<[1], [0], [0], [1], [0, 0, 1, 1], [], []>} : vector<8x32xbf16>, vector<32x128xbf16>, vector<8x128xf32> -> vector<8x128xf32>
    %95 = arith.addf %92, %94 : vector<8x128xf32>
    %96 = arith.negf %95 : vector<8x128xf32>
    %97 = math.exp %96 : vector<8x128xf32>
    %cst_38 = arith.constant 1.000000e+00 : f32
    %98 = vector.broadcast %cst_38 : f32 to vector<8x128xf32>
    %99 = arith.addf %98, %97 : vector<8x128xf32>
    %100 = arith.divf %98, %99 : vector<8x128xf32>
    %101 = math.tanh %95 : vector<8x128xf32>
    %102 = vector.extract_strided_slice %101 {offsets = [0, 96], sizes = [8, 32], strides = [1, 1]} : vector<8x128xf32> to vector<8x32xf32>
    %103 = vector.extract_strided_slice %100 {offsets = [0, 0], sizes = [8, 32], strides = [1, 1]} : vector<8x128xf32> to vector<8x32xf32>
    %104 = vector.extract_strided_slice %100 {offsets = [0, 32], sizes = [8, 32], strides = [1, 1]} : vector<8x128xf32> to vector<8x32xf32>
    %105 = vector.extract_strided_slice %100 {offsets = [0, 64], sizes = [8, 32], strides = [1, 1]} : vector<8x128xf32> to vector<8x32xf32>
    %106 = arith.mulf %104, %59 : vector<8x32xf32>
    %107 = arith.mulf %103, %102 : vector<8x32xf32>
    %108 = arith.addf %106, %107 : vector<8x32xf32>
    %109 = math.tanh %108 : vector<8x32xf32>
    %110 = arith.mulf %105, %109 : vector<8x32xf32>
    %111 = arith.index_cast %67 : i32 to index
    %c0_39 = arith.constant 0 : index
    %112 = vector.load %arg7[%111, %c0_39] : memref<64x32xf32, #tpu.memory_space<vmem>>, vector<8x32xf32>
    tpu.vector_store %arg7[%111, %c0_39], %90 {strides = array<i32>} : memref<64x32xf32, #tpu.memory_space<vmem>>, vector<8x32xf32>,
    %113 = arith.index_cast %70 : i32 to index
    %c0_40 = arith.constant 0 : index
    %114 = vector.load %arg11[%113, %c0_40] : memref<64x32xf32, #tpu.memory_space<vmem>>, vector<8x32xf32>
    tpu.vector_store %arg11[%113, %c0_40], %110 {strides = array<i32>} : memref<64x32xf32, #tpu.memory_space<vmem>>, vector<8x32xf32>,
    %c2_i32 = arith.constant 2 : i32
    %c8_i32_41 = arith.constant 8 : i32
    %115 = arith.muli %c2_i32, %c8_i32_41 : i32
    %116 = tpu.assume_multiple %115, 8 : i32
    %c7_i32_42 = arith.constant 7 : i32
    %117 = arith.subi %c7_i32_42, %c2_i32 : i32
    %c8_i32_43 = arith.constant 8 : i32
    %118 = arith.muli %117, %c8_i32_43 : i32
    %119 = tpu.assume_multiple %118, 8 : i32
    %120 = arith.index_cast %116 : i32 to index
    %c0_44 = arith.constant 0 : index
    %121 = vector.load %arg10[%120, %c0_44] : memref<64x256xf32, #tpu.memory_space<vmem>>, vector<8x128xf32>
    %122 = arith.truncf %90 : vector<8x32xf32> to vector<8x32xbf16>
    %cst_45 = arith.constant dense<0.000000e+00> : vector<8x128xf32>
    %123 = tpu.matmul %122, %7, %cst_45 {dimension_numbers = #tpu.dot_dimension_numbers<[1], [0], [0], [1], [0, 0, 1, 1], [], []>} : vector<8x32xbf16>, vector<32x128xbf16>, vector<8x128xf32> -> vector<8x128xf32>
    %124 = arith.addf %121, %123 : vector<8x128xf32>
    %125 = arith.negf %124 : vector<8x128xf32>
    %126 = math.exp %125 : vector<8x128xf32>
    %cst_46 = arith.constant 1.000000e+00 : f32
    %127 = vector.broadcast %cst_46 : f32 to vector<8x128xf32>
    %128 = arith.addf %127, %126 : vector<8x128xf32>
    %129 = arith.divf %127, %128 : vector<8x128xf32>
    %130 = math.tanh %124 : vector<8x128xf32>
    %131 = vector.extract_strided_slice %130 {offsets = [0, 96], sizes = [8, 32], strides = [1, 1]} : vector<8x128xf32> to vector<8x32xf32>
    %132 = vector.extract_strided_slice %129 {offsets = [0, 0], sizes = [8, 32], strides = [1, 1]} : vector<8x128xf32> to vector<8x32xf32>
    %133 = vector.extract_strided_slice %129 {offsets = [0, 32], sizes = [8, 32], strides = [1, 1]} : vector<8x128xf32> to vector<8x32xf32>
    %134 = vector.extract_strided_slice %129 {offsets = [0, 64], sizes = [8, 32], strides = [1, 1]} : vector<8x128xf32> to vector<8x32xf32>
    %135 = arith.mulf %133, %88 : vector<8x32xf32>
    %136 = arith.mulf %132, %131 : vector<8x32xf32>
    %137 = arith.addf %135, %136 : vector<8x32xf32>
    %138 = math.tanh %137 : vector<8x32xf32>
    %139 = arith.mulf %134, %138 : vector<8x32xf32>
    %140 = arith.index_cast %119 : i32 to index
    %c128_47 = arith.constant 128 : index
    %141 = vector.load %arg10[%140, %c128_47] : memref<64x256xf32, #tpu.memory_space<vmem>>, vector<8x128xf32>
    %142 = arith.truncf %110 : vector<8x32xf32> to vector<8x32xbf16>
    %cst_48 = arith.constant dense<0.000000e+00> : vector<8x128xf32>
    %143 = tpu.matmul %142, %8, %cst_48 {dimension_numbers = #tpu.dot_dimension_numbers<[1], [0], [0], [1], [0, 0, 1, 1], [], []>} : vector<8x32xbf16>, vector<32x128xbf16>, vector<8x128xf32> -> vector<8x128xf32>
    %144 = arith.addf %141, %143 : vector<8x128xf32>
    %145 = arith.negf %144 : vector<8x128xf32>
    %146 = math.exp %145 : vector<8x128xf32>
    %cst_49 = arith.constant 1.000000e+00 : f32
    %147 = vector.broadcast %cst_49 : f32 to vector<8x128xf32>
    %148 = arith.addf %147, %146 : vector<8x128xf32>
    %149 = arith.divf %147, %148 : vector<8x128xf32>
    %150 = math.tanh %144 : vector<8x128xf32>
    %151 = vector.extract_strided_slice %150 {offsets = [0, 96], sizes = [8, 32], strides = [1, 1]} : vector<8x128xf32> to vector<8x32xf32>
    %152 = vector.extract_strided_slice %149 {offsets = [0, 0], sizes = [8, 32], strides = [1, 1]} : vector<8x128xf32> to vector<8x32xf32>
    %153 = vector.extract_strided_slice %149 {offsets = [0, 32], sizes = [8, 32], strides = [1, 1]} : vector<8x128xf32> to vector<8x32xf32>
    %154 = vector.extract_strided_slice %149 {offsets = [0, 64], sizes = [8, 32], strides = [1, 1]} : vector<8x128xf32> to vector<8x32xf32>
    %155 = arith.mulf %153, %108 : vector<8x32xf32>
    %156 = arith.mulf %152, %151 : vector<8x32xf32>
    %157 = arith.addf %155, %156 : vector<8x32xf32>
    %158 = math.tanh %157 : vector<8x32xf32>
    %159 = arith.mulf %154, %158 : vector<8x32xf32>
    %160 = arith.index_cast %116 : i32 to index
    %c0_50 = arith.constant 0 : index
    %161 = vector.load %arg7[%160, %c0_50] : memref<64x32xf32, #tpu.memory_space<vmem>>, vector<8x32xf32>
    tpu.vector_store %arg7[%160, %c0_50], %139 {strides = array<i32>} : memref<64x32xf32, #tpu.memory_space<vmem>>, vector<8x32xf32>,
    %162 = arith.index_cast %119 : i32 to index
    %c0_51 = arith.constant 0 : index
    %163 = vector.load %arg11[%162, %c0_51] : memref<64x32xf32, #tpu.memory_space<vmem>>, vector<8x32xf32>
    tpu.vector_store %arg11[%162, %c0_51], %159 {strides = array<i32>} : memref<64x32xf32, #tpu.memory_space<vmem>>, vector<8x32xf32>,
    %c3_i32 = arith.constant 3 : i32
    %c8_i32_52 = arith.constant 8 : i32
    %164 = arith.muli %c3_i32, %c8_i32_52 : i32
    %165 = tpu.assume_multiple %164, 8 : i32
    %c7_i32_53 = arith.constant 7 : i32
    %166 = arith.subi %c7_i32_53, %c3_i32 : i32
    %c8_i32_54 = arith.constant 8 : i32
    %167 = arith.muli %166, %c8_i32_54 : i32
    %168 = tpu.assume_multiple %167, 8 : i32
    %169 = arith.index_cast %165 : i32 to index
    %c0_55 = arith.constant 0 : index
    %170 = vector.load %arg10[%169, %c0_55] : memref<64x256xf32, #tpu.memory_space<vmem>>, vector<8x128xf32>
    %171 = arith.truncf %139 : vector<8x32xf32> to vector<8x32xbf16>
    %cst_56 = arith.constant dense<0.000000e+00> : vector<8x128xf32>
    %172 = tpu.matmul %171, %7, %cst_56 {dimension_numbers = #tpu.dot_dimension_numbers<[1], [0], [0], [1], [0, 0, 1, 1], [], []>} : vector<8x32xbf16>, vector<32x128xbf16>, vector<8x128xf32> -> vector<8x128xf32>
    %173 = arith.addf %170, %172 : vector<8x128xf32>
    %174 = arith.negf %173 : vector<8x128xf32>
    %175 = math.exp %174 : vector<8x128xf32>
    %cst_57 = arith.constant 1.000000e+00 : f32
    %176 = vector.broadcast %cst_57 : f32 to vector<8x128xf32>
    %177 = arith.addf %176, %175 : vector<8x128xf32>
    %178 = arith.divf %176, %177 : vector<8x128xf32>
    %179 = math.tanh %173 : vector<8x128xf32>
    %180 = vector.extract_strided_slice %179 {offsets = [0, 96], sizes = [8, 32], strides = [1, 1]} : vector<8x128xf32> to vector<8x32xf32>
    %181 = vector.extract_strided_slice %178 {offsets = [0, 0], sizes = [8, 32], strides = [1, 1]} : vector<8x128xf32> to vector<8x32xf32>
    %182 = vector.extract_strided_slice %178 {offsets = [0, 32], sizes = [8, 32], strides = [1, 1]} : vector<8x128xf32> to vector<8x32xf32>
    %183 = vector.extract_strided_slice %178 {offsets = [0, 64], sizes = [8, 32], strides = [1, 1]} : vector<8x128xf32> to vector<8x32xf32>
    %184 = arith.mulf %182, %137 : vector<8x32xf32>
    %185 = arith.mulf %181, %180 : vector<8x32xf32>
    %186 = arith.addf %184, %185 : vector<8x32xf32>
    %187 = math.tanh %186 : vector<8x32xf32>
    %188 = arith.mulf %183, %187 : vector<8x32xf32>
    %189 = arith.index_cast %168 : i32 to index
    %c128_58 = arith.constant 128 : index
    %190 = vector.load %arg10[%189, %c128_58] : memref<64x256xf32, #tpu.memory_space<vmem>>, vector<8x128xf32>
    %191 = arith.truncf %159 : vector<8x32xf32> to vector<8x32xbf16>
    %cst_59 = arith.constant dense<0.000000e+00> : vector<8x128xf32>
    %192 = tpu.matmul %191, %8, %cst_59 {dimension_numbers = #tpu.dot_dimension_numbers<[1], [0], [0], [1], [0, 0, 1, 1], [], []>} : vector<8x32xbf16>, vector<32x128xbf16>, vector<8x128xf32> -> vector<8x128xf32>
    %193 = arith.addf %190, %192 : vector<8x128xf32>
    %194 = arith.negf %193 : vector<8x128xf32>
    %195 = math.exp %194 : vector<8x128xf32>
    %cst_60 = arith.constant 1.000000e+00 : f32
    %196 = vector.broadcast %cst_60 : f32 to vector<8x128xf32>
    %197 = arith.addf %196, %195 : vector<8x128xf32>
    %198 = arith.divf %196, %197 : vector<8x128xf32>
    %199 = math.tanh %193 : vector<8x128xf32>
    %200 = vector.extract_strided_slice %199 {offsets = [0, 96], sizes = [8, 32], strides = [1, 1]} : vector<8x128xf32> to vector<8x32xf32>
    %201 = vector.extract_strided_slice %198 {offsets = [0, 0], sizes = [8, 32], strides = [1, 1]} : vector<8x128xf32> to vector<8x32xf32>
    %202 = vector.extract_strided_slice %198 {offsets = [0, 32], sizes = [8, 32], strides = [1, 1]} : vector<8x128xf32> to vector<8x32xf32>
    %203 = vector.extract_strided_slice %198 {offsets = [0, 64], sizes = [8, 32], strides = [1, 1]} : vector<8x128xf32> to vector<8x32xf32>
    %204 = arith.mulf %202, %157 : vector<8x32xf32>
    %205 = arith.mulf %201, %200 : vector<8x32xf32>
    %206 = arith.addf %204, %205 : vector<8x32xf32>
    %207 = math.tanh %206 : vector<8x32xf32>
    %208 = arith.mulf %203, %207 : vector<8x32xf32>
    %209 = arith.index_cast %165 : i32 to index
    %c0_61 = arith.constant 0 : index
    %210 = vector.load %arg7[%209, %c0_61] : memref<64x32xf32, #tpu.memory_space<vmem>>, vector<8x32xf32>
    tpu.vector_store %arg7[%209, %c0_61], %188 {strides = array<i32>} : memref<64x32xf32, #tpu.memory_space<vmem>>, vector<8x32xf32>,
    %211 = arith.index_cast %168 : i32 to index
    %c0_62 = arith.constant 0 : index
    %212 = vector.load %arg11[%211, %c0_62] : memref<64x32xf32, #tpu.memory_space<vmem>>, vector<8x32xf32>
    tpu.vector_store %arg11[%211, %c0_62], %208 {strides = array<i32>} : memref<64x32xf32, #tpu.memory_space<vmem>>, vector<8x32xf32>,
    %c4_i32 = arith.constant 4 : i32
    %c8_i32_63 = arith.constant 8 : i32
    %213 = arith.muli %c4_i32, %c8_i32_63 : i32
    %214 = tpu.assume_multiple %213, 8 : i32
    %c7_i32_64 = arith.constant 7 : i32
    %215 = arith.subi %c7_i32_64, %c4_i32 : i32
    %c8_i32_65 = arith.constant 8 : i32
    %216 = arith.muli %215, %c8_i32_65 : i32
    %217 = tpu.assume_multiple %216, 8 : i32
    %218 = arith.index_cast %214 : i32 to index
    %c0_66 = arith.constant 0 : index
    %219 = vector.load %arg10[%218, %c0_66] : memref<64x256xf32, #tpu.memory_space<vmem>>, vector<8x128xf32>
    %220 = arith.truncf %188 : vector<8x32xf32> to vector<8x32xbf16>
    %cst_67 = arith.constant dense<0.000000e+00> : vector<8x128xf32>
    %221 = tpu.matmul %220, %7, %cst_67 {dimension_numbers = #tpu.dot_dimension_numbers<[1], [0], [0], [1], [0, 0, 1, 1], [], []>} : vector<8x32xbf16>, vector<32x128xbf16>, vector<8x128xf32> -> vector<8x128xf32>
    %222 = arith.addf %219, %221 : vector<8x128xf32>
    %223 = arith.negf %222 : vector<8x128xf32>
    %224 = math.exp %223 : vector<8x128xf32>
    %cst_68 = arith.constant 1.000000e+00 : f32
    %225 = vector.broadcast %cst_68 : f32 to vector<8x128xf32>
    %226 = arith.addf %225, %224 : vector<8x128xf32>
    %227 = arith.divf %225, %226 : vector<8x128xf32>
    %228 = math.tanh %222 : vector<8x128xf32>
    %229 = vector.extract_strided_slice %228 {offsets = [0, 96], sizes = [8, 32], strides = [1, 1]} : vector<8x128xf32> to vector<8x32xf32>
    %230 = vector.extract_strided_slice %227 {offsets = [0, 0], sizes = [8, 32], strides = [1, 1]} : vector<8x128xf32> to vector<8x32xf32>
    %231 = vector.extract_strided_slice %227 {offsets = [0, 32], sizes = [8, 32], strides = [1, 1]} : vector<8x128xf32> to vector<8x32xf32>
    %232 = vector.extract_strided_slice %227 {offsets = [0, 64], sizes = [8, 32], strides = [1, 1]} : vector<8x128xf32> to vector<8x32xf32>
    %233 = arith.mulf %231, %186 : vector<8x32xf32>
    %234 = arith.mulf %230, %229 : vector<8x32xf32>
    %235 = arith.addf %233, %234 : vector<8x32xf32>
    %236 = math.tanh %235 : vector<8x32xf32>
    %237 = arith.mulf %232, %236 : vector<8x32xf32>
    %238 = arith.index_cast %217 : i32 to index
    %c128_69 = arith.constant 128 : index
    %239 = vector.load %arg10[%238, %c128_69] : memref<64x256xf32, #tpu.memory_space<vmem>>, vector<8x128xf32>
    %240 = arith.truncf %208 : vector<8x32xf32> to vector<8x32xbf16>
    %cst_70 = arith.constant dense<0.000000e+00> : vector<8x128xf32>
    %241 = tpu.matmul %240, %8, %cst_70 {dimension_numbers = #tpu.dot_dimension_numbers<[1], [0], [0], [1], [0, 0, 1, 1], [], []>} : vector<8x32xbf16>, vector<32x128xbf16>, vector<8x128xf32> -> vector<8x128xf32>
    %242 = arith.addf %239, %241 : vector<8x128xf32>
    %243 = arith.negf %242 : vector<8x128xf32>
    %244 = math.exp %243 : vector<8x128xf32>
    %cst_71 = arith.constant 1.000000e+00 : f32
    %245 = vector.broadcast %cst_71 : f32 to vector<8x128xf32>
    %246 = arith.addf %245, %244 : vector<8x128xf32>
    %247 = arith.divf %245, %246 : vector<8x128xf32>
    %248 = math.tanh %242 : vector<8x128xf32>
    %249 = vector.extract_strided_slice %248 {offsets = [0, 96], sizes = [8, 32], strides = [1, 1]} : vector<8x128xf32> to vector<8x32xf32>
    %250 = vector.extract_strided_slice %247 {offsets = [0, 0], sizes = [8, 32], strides = [1, 1]} : vector<8x128xf32> to vector<8x32xf32>
    %251 = vector.extract_strided_slice %247 {offsets = [0, 32], sizes = [8, 32], strides = [1, 1]} : vector<8x128xf32> to vector<8x32xf32>
    %252 = vector.extract_strided_slice %247 {offsets = [0, 64], sizes = [8, 32], strides = [1, 1]} : vector<8x128xf32> to vector<8x32xf32>
    %253 = arith.mulf %251, %206 : vector<8x32xf32>
    %254 = arith.mulf %250, %249 : vector<8x32xf32>
    %255 = arith.addf %253, %254 : vector<8x32xf32>
    %256 = math.tanh %255 : vector<8x32xf32>
    %257 = arith.mulf %252, %256 : vector<8x32xf32>
    %258 = arith.index_cast %214 : i32 to index
    %c0_72 = arith.constant 0 : index
    %259 = vector.load %arg7[%258, %c0_72] : memref<64x32xf32, #tpu.memory_space<vmem>>, vector<8x32xf32>
    tpu.vector_store %arg7[%258, %c0_72], %237 {strides = array<i32>} : memref<64x32xf32, #tpu.memory_space<vmem>>, vector<8x32xf32>,
    %260 = arith.index_cast %217 : i32 to index
    %c0_73 = arith.constant 0 : index
    %261 = vector.load %arg11[%260, %c0_73] : memref<64x32xf32, #tpu.memory_space<vmem>>, vector<8x32xf32>
    tpu.vector_store %arg11[%260, %c0_73], %257 {strides = array<i32>} : memref<64x32xf32, #tpu.memory_space<vmem>>, vector<8x32xf32>,
    %c5_i32 = arith.constant 5 : i32
    %c8_i32_74 = arith.constant 8 : i32
    %262 = arith.muli %c5_i32, %c8_i32_74 : i32
    %263 = tpu.assume_multiple %262, 8 : i32
    %c7_i32_75 = arith.constant 7 : i32
    %264 = arith.subi %c7_i32_75, %c5_i32 : i32
    %c8_i32_76 = arith.constant 8 : i32
    %265 = arith.muli %264, %c8_i32_76 : i32
    %266 = tpu.assume_multiple %265, 8 : i32
    %267 = arith.index_cast %263 : i32 to index
    %c0_77 = arith.constant 0 : index
    %268 = vector.load %arg10[%267, %c0_77] : memref<64x256xf32, #tpu.memory_space<vmem>>, vector<8x128xf32>
    %269 = arith.truncf %237 : vector<8x32xf32> to vector<8x32xbf16>
    %cst_78 = arith.constant dense<0.000000e+00> : vector<8x128xf32>
    %270 = tpu.matmul %269, %7, %cst_78 {dimension_numbers = #tpu.dot_dimension_numbers<[1], [0], [0], [1], [0, 0, 1, 1], [], []>} : vector<8x32xbf16>, vector<32x128xbf16>, vector<8x128xf32> -> vector<8x128xf32>
    %271 = arith.addf %268, %270 : vector<8x128xf32>
    %272 = arith.negf %271 : vector<8x128xf32>
    %273 = math.exp %272 : vector<8x128xf32>
    %cst_79 = arith.constant 1.000000e+00 : f32
    %274 = vector.broadcast %cst_79 : f32 to vector<8x128xf32>
    %275 = arith.addf %274, %273 : vector<8x128xf32>
    %276 = arith.divf %274, %275 : vector<8x128xf32>
    %277 = math.tanh %271 : vector<8x128xf32>
    %278 = vector.extract_strided_slice %277 {offsets = [0, 96], sizes = [8, 32], strides = [1, 1]} : vector<8x128xf32> to vector<8x32xf32>
    %279 = vector.extract_strided_slice %276 {offsets = [0, 0], sizes = [8, 32], strides = [1, 1]} : vector<8x128xf32> to vector<8x32xf32>
    %280 = vector.extract_strided_slice %276 {offsets = [0, 32], sizes = [8, 32], strides = [1, 1]} : vector<8x128xf32> to vector<8x32xf32>
    %281 = vector.extract_strided_slice %276 {offsets = [0, 64], sizes = [8, 32], strides = [1, 1]} : vector<8x128xf32> to vector<8x32xf32>
    %282 = arith.mulf %280, %235 : vector<8x32xf32>
    %283 = arith.mulf %279, %278 : vector<8x32xf32>
    %284 = arith.addf %282, %283 : vector<8x32xf32>
    %285 = math.tanh %284 : vector<8x32xf32>
    %286 = arith.mulf %281, %285 : vector<8x32xf32>
    %287 = arith.index_cast %266 : i32 to index
    %c128_80 = arith.constant 128 : index
    %288 = vector.load %arg10[%287, %c128_80] : memref<64x256xf32, #tpu.memory_space<vmem>>, vector<8x128xf32>
    %289 = arith.truncf %257 : vector<8x32xf32> to vector<8x32xbf16>
    %cst_81 = arith.constant dense<0.000000e+00> : vector<8x128xf32>
    %290 = tpu.matmul %289, %8, %cst_81 {dimension_numbers = #tpu.dot_dimension_numbers<[1], [0], [0], [1], [0, 0, 1, 1], [], []>} : vector<8x32xbf16>, vector<32x128xbf16>, vector<8x128xf32> -> vector<8x128xf32>
    %291 = arith.addf %288, %290 : vector<8x128xf32>
    %292 = arith.negf %291 : vector<8x128xf32>
    %293 = math.exp %292 : vector<8x128xf32>
    %cst_82 = arith.constant 1.000000e+00 : f32
    %294 = vector.broadcast %cst_82 : f32 to vector<8x128xf32>
    %295 = arith.addf %294, %293 : vector<8x128xf32>
    %296 = arith.divf %294, %295 : vector<8x128xf32>
    %297 = math.tanh %291 : vector<8x128xf32>
    %298 = vector.extract_strided_slice %297 {offsets = [0, 96], sizes = [8, 32], strides = [1, 1]} : vector<8x128xf32> to vector<8x32xf32>
    %299 = vector.extract_strided_slice %296 {offsets = [0, 0], sizes = [8, 32], strides = [1, 1]} : vector<8x128xf32> to vector<8x32xf32>
    %300 = vector.extract_strided_slice %296 {offsets = [0, 32], sizes = [8, 32], strides = [1, 1]} : vector<8x128xf32> to vector<8x32xf32>
    %301 = vector.extract_strided_slice %296 {offsets = [0, 64], sizes = [8, 32], strides = [1, 1]} : vector<8x128xf32> to vector<8x32xf32>
    %302 = arith.mulf %300, %255 : vector<8x32xf32>
    %303 = arith.mulf %299, %298 : vector<8x32xf32>
    %304 = arith.addf %302, %303 : vector<8x32xf32>
    %305 = math.tanh %304 : vector<8x32xf32>
    %306 = arith.mulf %301, %305 : vector<8x32xf32>
    %307 = arith.index_cast %263 : i32 to index
    %c0_83 = arith.constant 0 : index
    %308 = vector.load %arg7[%307, %c0_83] : memref<64x32xf32, #tpu.memory_space<vmem>>, vector<8x32xf32>
    tpu.vector_store %arg7[%307, %c0_83], %286 {strides = array<i32>} : memref<64x32xf32, #tpu.memory_space<vmem>>, vector<8x32xf32>,
    %309 = arith.index_cast %266 : i32 to index
    %c0_84 = arith.constant 0 : index
    %310 = vector.load %arg11[%309, %c0_84] : memref<64x32xf32, #tpu.memory_space<vmem>>, vector<8x32xf32>
    tpu.vector_store %arg11[%309, %c0_84], %306 {strides = array<i32>} : memref<64x32xf32, #tpu.memory_space<vmem>>, vector<8x32xf32>,
    %c6_i32 = arith.constant 6 : i32
    %c8_i32_85 = arith.constant 8 : i32
    %311 = arith.muli %c6_i32, %c8_i32_85 : i32
    %312 = tpu.assume_multiple %311, 8 : i32
    %c7_i32_86 = arith.constant 7 : i32
    %313 = arith.subi %c7_i32_86, %c6_i32 : i32
    %c8_i32_87 = arith.constant 8 : i32
    %314 = arith.muli %313, %c8_i32_87 : i32
    %315 = tpu.assume_multiple %314, 8 : i32
    %316 = arith.index_cast %312 : i32 to index
    %c0_88 = arith.constant 0 : index
    %317 = vector.load %arg10[%316, %c0_88] : memref<64x256xf32, #tpu.memory_space<vmem>>, vector<8x128xf32>
    %318 = arith.truncf %286 : vector<8x32xf32> to vector<8x32xbf16>
    %cst_89 = arith.constant dense<0.000000e+00> : vector<8x128xf32>
    %319 = tpu.matmul %318, %7, %cst_89 {dimension_numbers = #tpu.dot_dimension_numbers<[1], [0], [0], [1], [0, 0, 1, 1], [], []>} : vector<8x32xbf16>, vector<32x128xbf16>, vector<8x128xf32> -> vector<8x128xf32>
    %320 = arith.addf %317, %319 : vector<8x128xf32>
    %321 = arith.negf %320 : vector<8x128xf32>
    %322 = math.exp %321 : vector<8x128xf32>
    %cst_90 = arith.constant 1.000000e+00 : f32
    %323 = vector.broadcast %cst_90 : f32 to vector<8x128xf32>
    %324 = arith.addf %323, %322 : vector<8x128xf32>
    %325 = arith.divf %323, %324 : vector<8x128xf32>
    %326 = math.tanh %320 : vector<8x128xf32>
    %327 = vector.extract_strided_slice %326 {offsets = [0, 96], sizes = [8, 32], strides = [1, 1]} : vector<8x128xf32> to vector<8x32xf32>
    %328 = vector.extract_strided_slice %325 {offsets = [0, 0], sizes = [8, 32], strides = [1, 1]} : vector<8x128xf32> to vector<8x32xf32>
    %329 = vector.extract_strided_slice %325 {offsets = [0, 32], sizes = [8, 32], strides = [1, 1]} : vector<8x128xf32> to vector<8x32xf32>
    %330 = vector.extract_strided_slice %325 {offsets = [0, 64], sizes = [8, 32], strides = [1, 1]} : vector<8x128xf32> to vector<8x32xf32>
    %331 = arith.mulf %329, %284 : vector<8x32xf32>
    %332 = arith.mulf %328, %327 : vector<8x32xf32>
    %333 = arith.addf %331, %332 : vector<8x32xf32>
    %334 = math.tanh %333 : vector<8x32xf32>
    %335 = arith.mulf %330, %334 : vector<8x32xf32>
    %336 = arith.index_cast %315 : i32 to index
    %c128_91 = arith.constant 128 : index
    %337 = vector.load %arg10[%336, %c128_91] : memref<64x256xf32, #tpu.memory_space<vmem>>, vector<8x128xf32>
    %338 = arith.truncf %306 : vector<8x32xf32> to vector<8x32xbf16>
    %cst_92 = arith.constant dense<0.000000e+00> : vector<8x128xf32>
    %339 = tpu.matmul %338, %8, %cst_92 {dimension_numbers = #tpu.dot_dimension_numbers<[1], [0], [0], [1], [0, 0, 1, 1], [], []>} : vector<8x32xbf16>, vector<32x128xbf16>, vector<8x128xf32> -> vector<8x128xf32>
    %340 = arith.addf %337, %339 : vector<8x128xf32>
    %341 = arith.negf %340 : vector<8x128xf32>
    %342 = math.exp %341 : vector<8x128xf32>
    %cst_93 = arith.constant 1.000000e+00 : f32
    %343 = vector.broadcast %cst_93 : f32 to vector<8x128xf32>
    %344 = arith.addf %343, %342 : vector<8x128xf32>
    %345 = arith.divf %343, %344 : vector<8x128xf32>
    %346 = math.tanh %340 : vector<8x128xf32>
    %347 = vector.extract_strided_slice %346 {offsets = [0, 96], sizes = [8, 32], strides = [1, 1]} : vector<8x128xf32> to vector<8x32xf32>
    %348 = vector.extract_strided_slice %345 {offsets = [0, 0], sizes = [8, 32], strides = [1, 1]} : vector<8x128xf32> to vector<8x32xf32>
    %349 = vector.extract_strided_slice %345 {offsets = [0, 32], sizes = [8, 32], strides = [1, 1]} : vector<8x128xf32> to vector<8x32xf32>
    %350 = vector.extract_strided_slice %345 {offsets = [0, 64], sizes = [8, 32], strides = [1, 1]} : vector<8x128xf32> to vector<8x32xf32>
    %351 = arith.mulf %349, %304 : vector<8x32xf32>
    %352 = arith.mulf %348, %347 : vector<8x32xf32>
    %353 = arith.addf %351, %352 : vector<8x32xf32>
    %354 = math.tanh %353 : vector<8x32xf32>
    %355 = arith.mulf %350, %354 : vector<8x32xf32>
    %356 = arith.index_cast %312 : i32 to index
    %c0_94 = arith.constant 0 : index
    %357 = vector.load %arg7[%356, %c0_94] : memref<64x32xf32, #tpu.memory_space<vmem>>, vector<8x32xf32>
    tpu.vector_store %arg7[%356, %c0_94], %335 {strides = array<i32>} : memref<64x32xf32, #tpu.memory_space<vmem>>, vector<8x32xf32>,
    %358 = arith.index_cast %315 : i32 to index
    %c0_95 = arith.constant 0 : index
    %359 = vector.load %arg11[%358, %c0_95] : memref<64x32xf32, #tpu.memory_space<vmem>>, vector<8x32xf32>
    tpu.vector_store %arg11[%358, %c0_95], %355 {strides = array<i32>} : memref<64x32xf32, #tpu.memory_space<vmem>>, vector<8x32xf32>,
    %c7_i32_96 = arith.constant 7 : i32
    %c8_i32_97 = arith.constant 8 : i32
    %360 = arith.muli %c7_i32_96, %c8_i32_97 : i32
    %361 = tpu.assume_multiple %360, 8 : i32
    %c7_i32_98 = arith.constant 7 : i32
    %362 = arith.subi %c7_i32_98, %c7_i32_96 : i32
    %c8_i32_99 = arith.constant 8 : i32
    %363 = arith.muli %362, %c8_i32_99 : i32
    %364 = tpu.assume_multiple %363, 8 : i32
    %365 = arith.index_cast %361 : i32 to index
    %c0_100 = arith.constant 0 : index
    %366 = vector.load %arg10[%365, %c0_100] : memref<64x256xf32, #tpu.memory_space<vmem>>, vector<8x128xf32>
    %367 = arith.truncf %335 : vector<8x32xf32> to vector<8x32xbf16>
    %cst_101 = arith.constant dense<0.000000e+00> : vector<8x128xf32>
    %368 = tpu.matmul %367, %7, %cst_101 {dimension_numbers = #tpu.dot_dimension_numbers<[1], [0], [0], [1], [0, 0, 1, 1], [], []>} : vector<8x32xbf16>, vector<32x128xbf16>, vector<8x128xf32> -> vector<8x128xf32>
    %369 = arith.addf %366, %368 : vector<8x128xf32>
    %370 = arith.negf %369 : vector<8x128xf32>
    %371 = math.exp %370 : vector<8x128xf32>
    %cst_102 = arith.constant 1.000000e+00 : f32
    %372 = vector.broadcast %cst_102 : f32 to vector<8x128xf32>
    %373 = arith.addf %372, %371 : vector<8x128xf32>
    %374 = arith.divf %372, %373 : vector<8x128xf32>
    %375 = math.tanh %369 : vector<8x128xf32>
    %376 = vector.extract_strided_slice %375 {offsets = [0, 96], sizes = [8, 32], strides = [1, 1]} : vector<8x128xf32> to vector<8x32xf32>
    %377 = vector.extract_strided_slice %374 {offsets = [0, 0], sizes = [8, 32], strides = [1, 1]} : vector<8x128xf32> to vector<8x32xf32>
    %378 = vector.extract_strided_slice %374 {offsets = [0, 32], sizes = [8, 32], strides = [1, 1]} : vector<8x128xf32> to vector<8x32xf32>
    %379 = vector.extract_strided_slice %374 {offsets = [0, 64], sizes = [8, 32], strides = [1, 1]} : vector<8x128xf32> to vector<8x32xf32>
    %380 = arith.mulf %378, %333 : vector<8x32xf32>
    %381 = arith.mulf %377, %376 : vector<8x32xf32>
    %382 = arith.addf %380, %381 : vector<8x32xf32>
    %383 = math.tanh %382 : vector<8x32xf32>
    %384 = arith.mulf %379, %383 : vector<8x32xf32>
    %385 = arith.index_cast %364 : i32 to index
    %c128_103 = arith.constant 128 : index
    %386 = vector.load %arg10[%385, %c128_103] : memref<64x256xf32, #tpu.memory_space<vmem>>, vector<8x128xf32>
    %387 = arith.truncf %355 : vector<8x32xf32> to vector<8x32xbf16>
    %cst_104 = arith.constant dense<0.000000e+00> : vector<8x128xf32>
    %388 = tpu.matmul %387, %8, %cst_104 {dimension_numbers = #tpu.dot_dimension_numbers<[1], [0], [0], [1], [0, 0, 1, 1], [], []>} : vector<8x32xbf16>, vector<32x128xbf16>, vector<8x128xf32> -> vector<8x128xf32>
    %389 = arith.addf %386, %388 : vector<8x128xf32>
    %390 = arith.negf %389 : vector<8x128xf32>
    %391 = math.exp %390 : vector<8x128xf32>
    %cst_105 = arith.constant 1.000000e+00 : f32
    %392 = vector.broadcast %cst_105 : f32 to vector<8x128xf32>
    %393 = arith.addf %392, %391 : vector<8x128xf32>
    %394 = arith.divf %392, %393 : vector<8x128xf32>
    %395 = math.tanh %389 : vector<8x128xf32>
    %396 = vector.extract_strided_slice %395 {offsets = [0, 96], sizes = [8, 32], strides = [1, 1]} : vector<8x128xf32> to vector<8x32xf32>
    %397 = vector.extract_strided_slice %394 {offsets = [0, 0], sizes = [8, 32], strides = [1, 1]} : vector<8x128xf32> to vector<8x32xf32>
    %398 = vector.extract_strided_slice %394 {offsets = [0, 32], sizes = [8, 32], strides = [1, 1]} : vector<8x128xf32> to vector<8x32xf32>
    %399 = vector.extract_strided_slice %394 {offsets = [0, 64], sizes = [8, 32], strides = [1, 1]} : vector<8x128xf32> to vector<8x32xf32>
    %400 = arith.mulf %398, %353 : vector<8x32xf32>
    %401 = arith.mulf %397, %396 : vector<8x32xf32>
    %402 = arith.addf %400, %401 : vector<8x32xf32>
    %403 = math.tanh %402 : vector<8x32xf32>
    %404 = arith.mulf %399, %403 : vector<8x32xf32>
    %405 = arith.index_cast %361 : i32 to index
    %c0_106 = arith.constant 0 : index
    %406 = vector.load %arg7[%405, %c0_106] : memref<64x32xf32, #tpu.memory_space<vmem>>, vector<8x32xf32>
    tpu.vector_store %arg7[%405, %c0_106], %384 {strides = array<i32>} : memref<64x32xf32, #tpu.memory_space<vmem>>, vector<8x32xf32>,
    %407 = arith.index_cast %364 : i32 to index
    %c0_107 = arith.constant 0 : index
    %408 = vector.load %arg11[%407, %c0_107] : memref<64x32xf32, #tpu.memory_space<vmem>>, vector<8x32xf32>
    tpu.vector_store %arg11[%407, %c0_107], %404 {strides = array<i32>} : memref<64x32xf32, #tpu.memory_space<vmem>>, vector<8x32xf32>,
    %c8_i32_108 = arith.constant 8 : i32
    %c0_109 = arith.constant 0 : index
    %c0_110 = arith.constant 0 : index
    %409 = vector.load %arg7[%c0_109, %c0_110] : memref<64x32xf32, #tpu.memory_space<vmem>>, vector<64x32xf32>
    %c0_111 = arith.constant 0 : index
    %c0_112 = arith.constant 0 : index
    %410 = vector.load %arg11[%c0_111, %c0_112] : memref<64x32xf32, #tpu.memory_space<vmem>>, vector<64x32xf32>
    %411 = arith.addf %409, %410 : vector<64x32xf32>
    %c0_113 = arith.constant 0 : index
    %c0_114 = arith.constant 0 : index
    %412 = vector.load %arg7[%c0_113, %c0_114] : memref<64x32xf32, #tpu.memory_space<vmem>>, vector<64x32xf32>
    tpu.vector_store %arg7[%c0_113, %c0_114], %411 {strides = array<i32>} : memref<64x32xf32, #tpu.memory_space<vmem>>, vector<64x32xf32>,
    %c0_115 = arith.constant 0 : index
    %c0_116 = arith.constant 0 : index
    %c0_117 = arith.constant 0 : index
    %413 = vector.load %arg8[%c0_115, %c0_116, %c0_117] : memref<2x8x32xf32, #tpu.memory_space<vmem>>, vector<1x8x32xf32>
    %414 = vector.shape_cast %413 : vector<1x8x32xf32> to vector<8x32xf32>
    %415 = vector.shape_cast %384 : vector<8x32xf32> to vector<1x8x32xf32>
    tpu.vector_store %arg8[%c0_115, %c0_116, %c0_117], %415 {strides = array<i32>} : memref<2x8x32xf32, #tpu.memory_space<vmem>>, vector<1x8x32xf32>,
    %c1_118 = arith.constant 1 : index
    %c0_119 = arith.constant 0 : index
    %c0_120 = arith.constant 0 : index
    %416 = vector.load %arg8[%c1_118, %c0_119, %c0_120] : memref<2x8x32xf32, #tpu.memory_space<vmem>>, vector<1x8x32xf32>
    %417 = vector.shape_cast %416 : vector<1x8x32xf32> to vector<8x32xf32>
    %418 = vector.shape_cast %404 : vector<8x32xf32> to vector<1x8x32xf32>
    tpu.vector_store %arg8[%c1_118, %c0_119, %c0_120], %418 {strides = array<i32>} : memref<2x8x32xf32, #tpu.memory_space<vmem>>, vector<1x8x32xf32>,
    %c0_121 = arith.constant 0 : index
    %c0_122 = arith.constant 0 : index
    %c0_123 = arith.constant 0 : index
    %419 = vector.load %arg9[%c0_121, %c0_122, %c0_123] : memref<2x8x32xf32, #tpu.memory_space<vmem>>, vector<1x8x32xf32>
    %420 = vector.shape_cast %419 : vector<1x8x32xf32> to vector<8x32xf32>
    %421 = vector.shape_cast %382 : vector<8x32xf32> to vector<1x8x32xf32>
    tpu.vector_store %arg9[%c0_121, %c0_122, %c0_123], %421 {strides = array<i32>} : memref<2x8x32xf32, #tpu.memory_space<vmem>>, vector<1x8x32xf32>,
    %c1_124 = arith.constant 1 : index
    %c0_125 = arith.constant 0 : index
    %c0_126 = arith.constant 0 : index
    %422 = vector.load %arg9[%c1_124, %c0_125, %c0_126] : memref<2x8x32xf32, #tpu.memory_space<vmem>>, vector<1x8x32xf32>
    %423 = vector.shape_cast %422 : vector<1x8x32xf32> to vector<8x32xf32>
    %424 = vector.shape_cast %402 : vector<8x32xf32> to vector<1x8x32xf32>
    tpu.vector_store %arg9[%c1_124, %c0_125, %c0_126], %424 {strides = array<i32>} : memref<2x8x32xf32, #tpu.memory_space<vmem>>, vector<1x8x32xf32>,
    return
  }
}

</mosaic_0001>

<llo_original>
// kernel: tpu_custom_call.1
$region0: #{tpu_custom_call.1}
  #allocation0 [shape = 'u32[]', space=smem, size = 0x4, offset = 0x4, fixed_abs, tag = 'smem constant byte address 0x4 - core index']
  #allocation1 [shape = 'u32[144,128]{1,0:T(1,128)}', space=vmem, size = 0x12000, scoped, tag = 'internal scratch']
  #allocation2 [shape = 'f32[64,256]{1,0:T(8,128)}', space=vmem, size = 0x10000, scoped, tag = 'scratch operand']
  #allocation3 [shape = 'f32[64,32]{1,0:T(8,128)}', space=vmem, size = 0x8000, scoped, tag = 'scratch operand']
  %s0 = inlined_call_operand.vmem [shape: bf16[64,16], index: 0, kind: input, shape index: {}]
  %s1 = inlined_call_operand.vmem [shape: bf16[16,256], index: 1, kind: input, shape index: {}]
  %s2 = inlined_call_operand.vmem [shape: f32[1,256], index: 2, kind: input, shape index: {}]
  %s3 = inlined_call_operand.vmem [shape: bf16[32,128], index: 3, kind: input, shape index: {}]
  %s4 = inlined_call_operand.vmem [shape: bf16[32,128], index: 4, kind: input, shape index: {}]
  %s5 = inlined_call_operand.hbm [shape: f32[2,8,32], index: 5, kind: input, shape index: {}]
  %s6 = inlined_call_operand.hbm [shape: f32[2,8,32], index: 6, kind: input, shape index: {}]
  %s7 = inlined_call_operand.vmem [shape: f32[64,32], index: 7, kind: output, shape index: {0}]
  %s8 = inlined_call_operand.hbm [shape: f32[2,8,32], index: 8, kind: output, shape index: {1}]
  %s9 = inlined_call_operand.hbm [shape: f32[2,8,32], index: 9, kind: output, shape index: {2}]
  %10 = xla_tuple %s7, %s8, %s9
  %s11 = sld [smem:[#allocation0]]
  $region62: #{tpu_custom_call.1} parent=0
    _
  %s13 = ssub.s32 1, %s11
  %s14 = scalar_select 0, %s13, %s11
  $region1: #{tpu_custom_call.1} parent=0
    #allocation4 [shape = 'u8[8192]{0}', space=vmem, size = 0x2000, scoped, tag = 'input window, operand 5, single buffered']
    #allocation5 [shape = 's32[1]{0}', space=sflag, size = 0x4, scoped, tag = 'scoped memory for tpu_custom_call.1']
    #allocation6 [shape = 's32[1]{0}', space=sflag, size = 0x4, scoped, tag = 'scoped memory for tpu_custom_call.1']
    #allocation7 [shape = 'u8[8192]{0}', space=vmem, size = 0x2000, scoped, tag = 'input window, operand 6, single buffered']
    #allocation8 [shape = 's32[1]{0}', space=sflag, size = 0x4, scoped, tag = 'scoped memory for tpu_custom_call.1']
    #allocation9 [shape = 'u8[8192]{0}', space=vmem, size = 0x2000, scoped, tag = 'output window, operand 1, single buffered']
    #allocation10 [shape = 'u8[8192]{0}', space=vmem, size = 0x2000, scoped, tag = 'output window, operand 2, single buffered']
    #allocation11 [shape = 's32[1]{0}', space=sflag, size = 0x4, scoped, tag = 'scoped memory for tpu_custom_call.1']
    %15 = vsyncpa [#allocation5], 0
    %16 = vsyncpa [#allocation8], 0
    %17 = vsyncpa [#allocation6], 0
    %18 = vsyncpa [#allocation11], 0
    // Predicated region
    $region2: #{tpu_custom_call.1} parent=1 // pred_check
      _
    $region3: #{tpu_custom_call.1} parent=1 // pred_check_branch
      %20 = sbr.rel (0) target = $region5
    $region4: #{tpu_custom_call.1} parent=1 // pred_region
      _
    $region5: #{tpu_custom_call.1} parent=1 // pred_fallthru
      _
    // Predicated region
    $region6: #{tpu_custom_call.1} parent=1 // pred_check
      _
    $region7: #{tpu_custom_call.1} parent=1 // pred_check_branch
      %22 = sbr.rel (0) target = $region9
    $region8: #{tpu_custom_call.1} parent=1 // pred_region
      _
    $region9: #{tpu_custom_call.1} parent=1 // pred_fallthru
      _
    // Predicated region
    $region10: #{tpu_custom_call.1} parent=1 // pred_check
      _
    $region11: #{tpu_custom_call.1} parent=1 // pred_check_branch
      %24 = sbr.rel (0) target = $region13
    $region12: #{tpu_custom_call.1} parent=1 // pred_region
      _
    $region13: #{tpu_custom_call.1} parent=1 // pred_fallthru
      _
    // Predicated region
    $region14: #{tpu_custom_call.1} parent=1 // pred_check
      _
    $region15: #{tpu_custom_call.1} parent=1 // pred_check_branch
      %26 = sbr.rel (0) target = $region17
    $region16: #{tpu_custom_call.1} parent=1 // pred_region
      _
    $region17: #{tpu_custom_call.1} parent=1 // pred_fallthru
      _
    // Predicated region
    $region18: #{tpu_custom_call.1} parent=1 // pred_check
      _
    $region19: #{tpu_custom_call.1} parent=1 // pred_check_branch
      %28 = sbr.rel (0) target = $region21
    $region20: #{tpu_custom_call.1} parent=1 // pred_region
      _
    $region21: #{tpu_custom_call.1} parent=1 // pred_fallthru
      _
    // Predicated region
    $region22: #{tpu_custom_call.1} parent=1 // pred_check
      _
    $region23: #{tpu_custom_call.1} parent=1 // pred_check_branch
      %30 = sbr.rel (0) target = $region25
    $region24: #{tpu_custom_call.1} parent=1 // pred_region
      %s32 = ssub.s32 256, 256
      %33 = vsyncadd [#allocation5], %s32
      %s34 = sshll.u32 [#allocation4], 4
      %s35 = int_to_ptr.vmem [resolvable:$true] %s34
      %40 = dma.hbm_to_vmem [thread:$0]  %s5, 256, %s35, [#allocation5], 128, 128, 8
    $region25: #{tpu_custom_call.1} parent=1 // pred_fallthru
      _
    // Predicated region
    $region26: #{tpu_custom_call.1} parent=1 // pred_check
      _
    $region27: #{tpu_custom_call.1} parent=1 // pred_check_branch
      %42 = sbr.rel (0) target = $region29
    $region28: #{tpu_custom_call.1} parent=1 // pred_region
      %s44 = ssub.s32 256, 256
      %45 = vsyncadd [#allocation8], %s44
      %s46 = sshll.u32 [#allocation7], 4
      %s47 = int_to_ptr.vmem [resolvable:$true] %s46
      %52 = dma.hbm_to_vmem [thread:$0]  %s6, 256, %s47, [#allocation8], 128, 128, 8
    $region29: #{tpu_custom_call.1} parent=1 // pred_fallthru
      _
    // Predicated region
    $region30: #{tpu_custom_call.1} parent=1 // pred_check
      _
    $region31: #{tpu_custom_call.1} parent=1 // pred_check_branch
      %54 = sbr.rel (0) target = $region33
    $region32: #{tpu_custom_call.1} parent=1 // pred_region
      %55 = dma.done [#allocation5], 256
    $region33: #{tpu_custom_call.1} parent=1 // pred_fallthru
      _
    // Predicated region
    $region34: #{tpu_custom_call.1} parent=1 // pred_check
      _
    $region35: #{tpu_custom_call.1} parent=1 // pred_check_branch
      %57 = sbr.rel (0) target = $region37
    $region36: #{tpu_custom_call.1} parent=1 // pred_region
      %58 = dma.done [#allocation8], 256
    $region37: #{tpu_custom_call.1} parent=1 // pred_fallthru
      _
    %v60 = vld [vmem:[%s0] sm:$0xf]
    %v61 = vld [vmem:[%s0 + $0x4] sm:$0xf]
    %v62 = vld [vmem:[%s0 + $0x8] sm:$0xf]
    %v63 = vld [vmem:[%s0 + $0xc] sm:$0xf]
    %v64 = vld [vmem:[%s0 + $0x10] sm:$0xf]
    %v65 = vld [vmem:[%s0 + $0x14] sm:$0xf]
    %v66 = vld [vmem:[%s0 + $0x18] sm:$0xf]
    %v67 = vld [vmem:[%s0 + $0x1c] sm:$0xf]
    %v68 = vld [vmem:[%s1] sm:$0xff]
    %v69 = vld [vmem:[%s1 + $0x8] sm:$0xff]
    %v70 = vld [vmem:[%s2] sm:$0x3]
    %v72 = vlaneseq
    %v73 = vshrl.u32 %v72, 7
    %v74 = vsub.s32 0, %v73
    %v75 = vrot.slane %v70, %v74
    %v76 = vlaneseq
    %v77 = vshrl.u32 %v76, 7
    %v78 = vsub.s32 1, %v77
    %v79 = vrot.slane %v70, %v78
    %v90 = vunpack.c.l.b16 %v60
    %v91 = vunpack.c.l.b16 %v61
    %v92 = vunpack.c.l.b16 %v62
    %v93 = vunpack.c.l.b16 %v63
    %v94 = vunpack.c.l.b16 %v64
    %v95 = vunpack.c.l.b16 %v65
    %v96 = vunpack.c.l.b16 %v66
    %v97 = vunpack.c.l.b16 %v67
    %v98 = vpack.c.b16 %v91, %v90
    %v99 = vpack.c.b16 %v93, %v92
    %v100 = vpack.c.b16 %v95, %v94
    %v101 = vpack.c.b16 %v97, %v96
    %v104 = vunpack.c.l.b16 %v68
    %v105 = vunpack.c.h.b16 %v68
    %v106 = vunpack.c.l.b16 %v69
    %v107 = vunpack.c.h.b16 %v69
    %v108 = vpack.c.b16 %v106, %v104
    %v109 = vpack.c.b16 %v107, %v105
    %vm112 = vcmask 130048
    %v114 = vsel %vm112, %v98, 0
    %v117 = vsel %vm112, %v99, 0
    %v120 = vsel %vm112, %v100, 0
    %v123 = vsel %vm112, %v101, 0
    %125 = vmatprep.subr.bf16.mxu0 %v109
    %126 = vmatpush1.bf16.msra.mxu0 %v108
    %127 = vmatprep.subr.bf16.mxu0 0
    %128 = vmatpush1.bf16.msra.mxu0 0
    %129 = vmatprep.subr.bf16.mxu0 0
    %130 = vmatpush1.bf16.msra.mxu0 0
    %131 = vmatprep.subr.bf16.mxu0 0
    %132 = vmatpush1.bf16.msra.mxu0 0
    %133 = vmatprep.subr.bf16.mxu0 0
    %134 = vmatpush1.bf16.msra.mxu0 0
    %135 = vmatprep.subr.bf16.mxu0 0
    %136 = vmatpush1.bf16.msra.mxu0 0
    %137 = vmatprep.subr.bf16.mxu0 0
    %138 = vmatpush1.bf16.msra.mxu0 0
    %139 = vmatprep.subr.bf16.mxu0 0
    %140 = vmatpush1.bf16.msra.mxu0 0
    %141 = vmatprep.subr.bf16.mxu0 0
    %142 = vmatpush1.bf16.msra.mxu0 0
    %143 = vmatprep.subr.bf16.mxu0 0
    %144 = vmatpush1.bf16.msra.mxu0 0
    %145 = vmatprep.subr.bf16.mxu0 0
    %146 = vmatpush1.bf16.msra.mxu0 0
    %147 = vmatprep.subr.bf16.mxu0 0
    %148 = vmatpush1.bf16.msra.mxu0 0
    %149 = vmatprep.subr.bf16.mxu0 0
    %150 = vmatpush1.bf16.msra.mxu0 0
    %151 = vmatprep.subr.bf16.mxu0 0
    %152 = vmatpush1.bf16.msra.mxu0 0
    %153 = vmatprep.subr.bf16.mxu0 0
    %154 = vmatpush1.bf16.msra.mxu0 0
    %155 = vmatprep.subr.bf16.mxu0 0
    %156 = vmatpush1.bf16.msra.mxu0 0
    %157 = vmatprep.mubr.bf16.mxu0 0
    %158 = vmatmul.mubr.bf16.gmra.mrb[0].mxu0 %v114
    %v159 = vpop.f32.mrb[0].mxu0
    %v160 = vadd.f32 %v75, %v159
    %v161 = vpop.f32.mrb[0].mxu0
    %v162 = vadd.f32 %v79, %v161
    %v163 = vpop.f32.mrb[0].mxu0
    %v164 = vadd.f32 %v75, %v163
    %v165 = vpop.f32.mrb[0].mxu0
    %v166 = vadd.f32 %v79, %v165
    %167 = vmatprep.mubr.bf16.mxu0 0
    %168 = vmatmul.mubr.bf16.gmra.mrb[0].mxu0 %v117
    %v169 = vpop.f32.mrb[0].mxu0
    %v170 = vadd.f32 %v75, %v169
    %v171 = vpop.f32.mrb[0].mxu0
    %v172 = vadd.f32 %v79, %v171
    %v173 = vpop.f32.mrb[0].mxu0
    %v174 = vadd.f32 %v75, %v173
    %v175 = vpop.f32.mrb[0].mxu0
    %v176 = vadd.f32 %v79, %v175
    %177 = vmatprep.mubr.bf16.mxu0 0
    %178 = vmatmul.mubr.bf16.gmra.mrb[0].mxu0 %v120
    %v179 = vpop.f32.mrb[0].mxu0
    %v180 = vadd.f32 %v75, %v179
    %v181 = vpop.f32.mrb[0].mxu0
    %v182 = vadd.f32 %v79, %v181
    %v183 = vpop.f32.mrb[0].mxu0
    %v184 = vadd.f32 %v75, %v183
    %v185 = vpop.f32.mrb[0].mxu0
    %v186 = vadd.f32 %v79, %v185
    %187 = vmatprep.mubr.bf16.mxu0 0
    %188 = vmatmul.mubr.bf16.gmra.mrb[0].mxu0 %v123
    %v189 = vpop.f32.mrb[0].mxu0
    %v190 = vadd.f32 %v75, %v189
    %v191 = vpop.f32.mrb[0].mxu0
    %v192 = vadd.f32 %v79, %v191
    %v193 = vpop.f32.mrb[0].mxu0
    %v194 = vadd.f32 %v75, %v193
    %v195 = vpop.f32.mrb[0].mxu0
    %v196 = vadd.f32 %v79, %v195
    %197 = vdwg.mxu0
    %198 = vst [vmem:[#allocation2] sm:$0xff] %v160
    %199 = vst [vmem:[#allocation2 + $0x8] sm:$0xff] %v162
    %200 = vst [vmem:[#allocation2 + $0x10] sm:$0xff] %v164
    %201 = vst [vmem:[#allocation2 + $0x18] sm:$0xff] %v166
    %202 = vst [vmem:[#allocation2 + $0x20] sm:$0xff] %v170
    %203 = vst [vmem:[#allocation2 + $0x28] sm:$0xff] %v172
    %204 = vst [vmem:[#allocation2 + $0x30] sm:$0xff] %v174
    %205 = vst [vmem:[#allocation2 + $0x38] sm:$0xff] %v176
    %206 = vst [vmem:[#allocation2 + $0x40] sm:$0xff] %v180
    %207 = vst [vmem:[#allocation2 + $0x48] sm:$0xff] %v182
    %208 = vst [vmem:[#allocation2 + $0x50] sm:$0xff] %v184
    %209 = vst [vmem:[#allocation2 + $0x58] sm:$0xff] %v186
    %210 = vst [vmem:[#allocation2 + $0x60] sm:$0xff] %v190
    %211 = vst [vmem:[#allocation2 + $0x68] sm:$0xff] %v192
    %212 = vst [vmem:[#allocation2 + $0x70] sm:$0xff] %v194
    %213 = vst [vmem:[#allocation2 + $0x78] sm:$0xff] %v196
    %v214 = vld [vmem:[%s3] sm:$0xf]
    %v215 = vld [vmem:[%s3 + $0x4] sm:$0xf]
    %v216 = vld [vmem:[%s3 + $0x8] sm:$0xf]
    %v217 = vld [vmem:[%s3 + $0xc] sm:$0xf]
    %v218 = vld [vmem:[%s4] sm:$0xf]
    %v219 = vld [vmem:[%s4 + $0x4] sm:$0xf]
    %v220 = vld [vmem:[%s4 + $0x8] sm:$0xf]
    %v221 = vld [vmem:[%s4 + $0xc] sm:$0xf]
    %v222 = vld [vmem:[#allocation4] sm:$0xff]
    %v223 = vld [vmem:[#allocation7] sm:$0xff]
    %s224 = scalar_lea.vmem [#allocation4], 8
    %v225 = vld [vmem:[%s224] sm:$0xff]
    %s226 = scalar_lea.vmem [#allocation7], 8
    %v227 = vld [vmem:[%s226] sm:$0xff]
    %s228 = smul.u32 0, 2
    %s229 = smul.addr %s228, 8
    %s230 = scalar_lea.vmem [#allocation2], %s229
    %v231 = vld [vmem:[%s230] sm:$0xff]
    %v232 = vpack.c.bf16 %v222, %v222
    %v237 = vunpack.c.l.b16 %v214
    %v238 = vunpack.c.l.b16 %v215
    %v239 = vunpack.c.l.b16 %v216
    %v240 = vunpack.c.l.b16 %v217
    %v241 = vpack.c.b16 %v238, %v237
    %v242 = vpack.c.b16 %v240, %v239
    %vm245 = vcmask 261120
    %v247 = vsel %vm245, %v232, 0
    %249 = vmatprep.subr.bf16.mxu0 0
    %250 = vmatpush1.bf16.msra.mxu0 %v241
    %251 = vmatprep.subr.bf16.mxu0 0
    %252 = vmatpush1.bf16.msra.mxu0 %v242
    %253 = vmatprep.subr.bf16.mxu0 0
    %254 = vmatpush1.bf16.msra.mxu0 0
    %255 = vmatprep.subr.bf16.mxu0 0
    %256 = vmatpush1.bf16.msra.mxu0 0
    %257 = vmatprep.subr.bf16.mxu0 0
    %258 = vmatpush1.bf16.msra.mxu0 0
    %259 = vmatprep.subr.bf16.mxu0 0
    %260 = vmatpush1.bf16.msra.mxu0 0
    %261 = vmatprep.subr.bf16.mxu0 0
    %262 = vmatpush1.bf16.msra.mxu0 0
    %263 = vmatprep.subr.bf16.mxu0 0
    %264 = vmatpush1.bf16.msra.mxu0 0
    %265 = vmatprep.subr.bf16.mxu0 0
    %266 = vmatpush1.bf16.msra.mxu0 0
    %267 = vmatprep.subr.bf16.mxu0 0
    %268 = vmatpush1.bf16.msra.mxu0 0
    %269 = vmatprep.subr.bf16.mxu0 0
    %270 = vmatpush1.bf16.msra.mxu0 0
    %271 = vmatprep.subr.bf16.mxu0 0
    %272 = vmatpush1.bf16.msra.mxu0 0
    %273 = vmatprep.subr.bf16.mxu0 0
    %274 = vmatpush1.bf16.msra.mxu0 0
    %275 = vmatprep.subr.bf16.mxu0 0
    %276 = vmatpush1.bf16.msra.mxu0 0
    %277 = vmatprep.subr.bf16.mxu0 0
    %278 = vmatpush1.bf16.msra.mxu0 0
    %279 = vmatprep.subr.bf16.mxu0 0
    %280 = vmatpush1.bf16.msra.mxu0 0
    %281 = vmatprep.mubr.bf16.mxu0 0
    %282 = vmatmul.mubr.bf16.gmra.mrb[0].mxu0 %v247
    %v283 = vpop.f32.mrb[0].mxu0
    %v284 = vadd.f32 0.0, %v283
    %v285 = vpop.f32.mrb[0].mxu0
    %v286 = vpop.f32.mrb[0].mxu0
    %v287 = vpop.f32.mrb[0].mxu0
    %288 = vdwg.mxu0
    %v289 = vadd.f32 %v231, %v284
    %v290 = vxor.u32 %v289, 2147483648
    %v291 = vmul.f32 %v290, 1.442695
    %v292 = vpow.pop %v291
    %v293 = vadd.f32 %v292, 1.0
    %v294 = vrcp.pop %v293
    %v295 = vmul.f32 1.0, %v294
    %v296 = vtanh.pop %v289
    %298 = vrot.lane.b32.xlu0 %v223, 32
    %v299 = vpop.permute.xlu0 %298
    %v301 = vmul.f32 %v295, %v299
    %303 = vrot.lane.b32.xlu0 %v296, 32
    %v304 = vpop.permute.xlu0 %303
    %v306 = vmul.f32 %v295, %v304
    %308 = vrot.lane.b32.xlu0 %v306, 32
    %v309 = vpop.permute.xlu0 %308
    %v311 = vadd.f32 %v301, %v309
    %v312 = vtanh.pop %v311
    %314 = vrot.lane.b32.xlu0 %v312, 32
    %v315 = vpop.permute.xlu0 %314
    %v317 = vmul.f32 %v295, %v315
    %s318 = smul.u32 7, 2
    %s319 = smul.addr %s318, 8
    %s320 = scalar_lea.vmem [#allocation2], %s319
    %v321 = vld [vmem:[%s320 + $0x8] sm:$0xff]
    %v322 = vpack.c.bf16 %v225, %v225
    %v327 = vunpack.c.l.b16 %v218
    %v328 = vunpack.c.l.b16 %v219
    %v329 = vunpack.c.l.b16 %v220
    %v330 = vunpack.c.l.b16 %v221
    %v331 = vpack.c.b16 %v328, %v327
    %v332 = vpack.c.b16 %v330, %v329
    %v336 = vsel %vm245, %v322, 0
    %338 = vmatprep.subr.bf16.mxu0 0
    %339 = vmatpush1.bf16.msra.mxu0 %v331
    %340 = vmatprep.subr.bf16.mxu0 0
    %341 = vmatpush1.bf16.msra.mxu0 %v332
    %342 = vmatprep.subr.bf16.mxu0 0
    %343 = vmatpush1.bf16.msra.mxu0 0
    %344 = vmatprep.subr.bf16.mxu0 0
    %345 = vmatpush1.bf16.msra.mxu0 0
    %346 = vmatprep.subr.bf16.mxu0 0
    %347 = vmatpush1.bf16.msra.mxu0 0
    %348 = vmatprep.subr.bf16.mxu0 0
    %349 = vmatpush1.bf16.msra.mxu0 0
    %350 = vmatprep.subr.bf16.mxu0 0
    %351 = vmatpush1.bf16.msra.mxu0 0
    %352 = vmatprep.subr.bf16.mxu0 0
    %353 = vmatpush1.bf16.msra.mxu0 0
    %354 = vmatprep.subr.bf16.mxu0 0
    %355 = vmatpush1.bf16.msra.mxu0 0
    %356 = vmatprep.subr.bf16.mxu0 0
    %357 = vmatpush1.bf16.msra.mxu0 0
    %358 = vmatprep.subr.bf16.mxu0 0
    %359 = vmatpush1.bf16.msra.mxu0 0
    %360 = vmatprep.subr.bf16.mxu0 0
    %361 = vmatpush1.bf16.msra.mxu0 0
    %362 = vmatprep.subr.bf16.mxu0 0
    %363 = vmatpush1.bf16.msra.mxu0 0
    %364 = vmatprep.subr.bf16.mxu0 0
    %365 = vmatpush1.bf16.msra.mxu0 0
    %366 = vmatprep.subr.bf16.mxu0 0
    %367 = vmatpush1.bf16.msra.mxu0 0
    %368 = vmatprep.subr.bf16.mxu0 0
    %369 = vmatpush1.bf16.msra.mxu0 0
    %370 = vmatprep.mubr.bf16.mxu0 0
    %371 = vmatmul.mubr.bf16.gmra.mrb[0].mxu0 %v336
    %v372 = vpop.f32.mrb[0].mxu0
    %v373 = vadd.f32 0.0, %v372
    %v374 = vpop.f32.mrb[0].mxu0
    %v375 = vpop.f32.mrb[0].mxu0
    %v376 = vpop.f32.mrb[0].mxu0
    %377 = vdwg.mxu0
    %v378 = vadd.f32 %v321, %v373
    %v379 = vxor.u32 %v378, 2147483648
    %v380 = vmul.f32 %v379, 1.442695
    %v381 = vpow.pop %v380
    %v382 = vadd.f32 %v381, 1.0
    %v383 = vrcp.pop %v382
    %v384 = vmul.f32 1.0, %v383
    %v385 = vtanh.pop %v378
    %387 = vrot.lane.b32.xlu0 %v227, 32
    %v388 = vpop.permute.xlu0 %387
    %v390 = vmul.f32 %v384, %v388
    %392 = vrot.lane.b32.xlu0 %v385, 32
    %v393 = vpop.permute.xlu0 %392
    %v395 = vmul.f32 %v384, %v393
    %397 = vrot.lane.b32.xlu0 %v395, 32
    %v398 = vpop.permute.xlu0 %397
    %v400 = vadd.f32 %v390, %v398
    %v401 = vtanh.pop %v400
    %403 = vrot.lane.b32.xlu0 %v401, 32
    %v404 = vpop.permute.xlu0 %403
    %v406 = vmul.f32 %v384, %v404
    %408 = vrot.lane.b32.xlu0 %v317, 64
    %v409 = vpop.permute.xlu0 %408
    %411 = vst.msk [vmem:[%s7] sm:$0xff] %vm245, %v409
    %413 = vrot.lane.b32.xlu0 %v406, 64
    %v414 = vpop.permute.xlu0 %413
    %s416 = scalar_lea.vmem [#allocation3], 56
    %417 = vst.msk [vmem:[%s416] sm:$0xff] %vm245, %v414
    %s418 = smul.u32 1, 2
    %s419 = smul.addr %s418, 8
    %s420 = scalar_lea.vmem [#allocation2], %s419
    %v421 = vld [vmem:[%s420] sm:$0xff]
    %v422 = vpack.c.bf16 %v317, %v317
    %424 = vrot.lane.b32.xlu0 %v422, 64
    %v425 = vpop.permute.xlu0 %424
    %v427 = vsel %vm245, %v425, 0
    %429 = vmatprep.subr.bf16.mxu0 0
    %430 = vmatpush1.bf16.msra.mxu0 %v241
    %431 = vmatprep.subr.bf16.mxu0 0
    %432 = vmatpush1.bf16.msra.mxu0 %v242
    %433 = vmatprep.subr.bf16.mxu0 0
    %434 = vmatpush1.bf16.msra.mxu0 0
    %435 = vmatprep.subr.bf16.mxu0 0
    %436 = vmatpush1.bf16.msra.mxu0 0
    %437 = vmatprep.subr.bf16.mxu0 0
    %438 = vmatpush1.bf16.msra.mxu0 0
    %439 = vmatprep.subr.bf16.mxu0 0
    %440 = vmatpush1.bf16.msra.mxu0 0
    %441 = vmatprep.subr.bf16.mxu0 0
    %442 = vmatpush1.bf16.msra.mxu0 0
    %443 = vmatprep.subr.bf16.mxu0 0
    %444 = vmatpush1.bf16.msra.mxu0 0
    %445 = vmatprep.subr.bf16.mxu0 0
    %446 = vmatpush1.bf16.msra.mxu0 0
    %447 = vmatprep.subr.bf16.mxu0 0
    %448 = vmatpush1.bf16.msra.mxu0 0
    %449 = vmatprep.subr.bf16.mxu0 0
    %450 = vmatpush1.bf16.msra.mxu0 0
    %451 = vmatprep.subr.bf16.mxu0 0
    %452 = vmatpush1.bf16.msra.mxu0 0
    %453 = vmatprep.subr.bf16.mxu0 0
    %454 = vmatpush1.bf16.msra.mxu0 0
    %455 = vmatprep.subr.bf16.mxu0 0
    %456 = vmatpush1.bf16.msra.mxu0 0
    %457 = vmatprep.subr.bf16.mxu0 0
    %458 = vmatpush1.bf16.msra.mxu0 0
    %459 = vmatprep.subr.bf16.mxu0 0
    %460 = vmatpush1.bf16.msra.mxu0 0
    %461 = vmatprep.mubr.bf16.mxu0 0
    %462 = vmatmul.mubr.bf16.gmra.mrb[0].mxu0 %v427
    %v463 = vpop.f32.mrb[0].mxu0
    %v464 = vadd.f32 0.0, %v463
    %v465 = vpop.f32.mrb[0].mxu0
    %v466 = vpop.f32.mrb[0].mxu0
    %v467 = vpop.f32.mrb[0].mxu0
    %468 = vdwg.mxu0
    %v469 = vadd.f32 %v421, %v464
    %v470 = vxor.u32 %v469, 2147483648
    %v471 = vmul.f32 %v470, 1.442695
    %v472 = vpow.pop %v471
    %v473 = vadd.f32 %v472, 1.0
    %v474 = vrcp.pop %v473
    %v475 = vmul.f32 1.0, %v474
    %v476 = vtanh.pop %v469
    %v477 = vmul.f32 %v475, %v311
    %479 = vrot.lane.b32.xlu0 %v476, 32
    %v480 = vpop.permute.xlu0 %479
    %v482 = vmul.f32 %v475, %v480
    %484 = vrot.lane.b32.xlu0 %v482, 32
    %v485 = vpop.permute.xlu0 %484
    %v487 = vadd.f32 %v477, %v485
    %v488 = vtanh.pop %v487
    %490 = vrot.lane.b32.xlu0 %v488, 32
    %v491 = vpop.permute.xlu0 %490
    %v493 = vmul.f32 %v475, %v491
    %s494 = smul.u32 6, 2
    %s495 = smul.addr %s494, 8
    %s496 = scalar_lea.vmem [#allocation2], %s495
    %v497 = vld [vmem:[%s496 + $0x8] sm:$0xff]
    %v498 = vpack.c.bf16 %v406, %v406
    %500 = vrot.lane.b32.xlu0 %v498, 64
    %v501 = vpop.permute.xlu0 %500
    %v503 = vsel %vm245, %v501, 0
    %505 = vmatprep.subr.bf16.mxu0 0
    %506 = vmatpush1.bf16.msra.mxu0 %v331
    %507 = vmatprep.subr.bf16.mxu0 0
    %508 = vmatpush1.bf16.msra.mxu0 %v332
    %509 = vmatprep.subr.bf16.mxu0 0
    %510 = vmatpush1.bf16.msra.mxu0 0
    %511 = vmatprep.subr.bf16.mxu0 0
    %512 = vmatpush1.bf16.msra.mxu0 0
    %513 = vmatprep.subr.bf16.mxu0 0
    %514 = vmatpush1.bf16.msra.mxu0 0
    %515 = vmatprep.subr.bf16.mxu0 0
    %516 = vmatpush1.bf16.msra.mxu0 0
    %517 = vmatprep.subr.bf16.mxu0 0
    %518 = vmatpush1.bf16.msra.mxu0 0
    %519 = vmatprep.subr.bf16.mxu0 0
    %520 = vmatpush1.bf16.msra.mxu0 0
    %521 = vmatprep.subr.bf16.mxu0 0
    %522 = vmatpush1.bf16.msra.mxu0 0
    %523 = vmatprep.subr.bf16.mxu0 0
    %524 = vmatpush1.bf16.msra.mxu0 0
    %525 = vmatprep.subr.bf16.mxu0 0
    %526 = vmatpush1.bf16.msra.mxu0 0
    %527 = vmatprep.subr.bf16.mxu0 0
    %528 = vmatpush1.bf16.msra.mxu0 0
    %529 = vmatprep.subr.bf16.mxu0 0
    %530 = vmatpush1.bf16.msra.mxu0 0
    %531 = vmatprep.subr.bf16.mxu0 0
    %532 = vmatpush1.bf16.msra.mxu0 0
    %533 = vmatprep.subr.bf16.mxu0 0
    %534 = vmatpush1.bf16.msra.mxu0 0
    %535 = vmatprep.subr.bf16.mxu0 0
    %536 = vmatpush1.bf16.msra.mxu0 0
    %537 = vmatprep.mubr.bf16.mxu0 0
    %538 = vmatmul.mubr.bf16.gmra.mrb[0].mxu0 %v503
    %v539 = vpop.f32.mrb[0].mxu0
    %v540 = vadd.f32 0.0, %v539
    %v541 = vpop.f32.mrb[0].mxu0
    %v542 = vpop.f32.mrb[0].mxu0
    %v543 = vpop.f32.mrb[0].mxu0
    %544 = vdwg.mxu0
    %v545 = vadd.f32 %v497, %v540
    %v546 = vxor.u32 %v545, 2147483648
    %v547 = vmul.f32 %v546, 1.442695
    %v548 = vpow.pop %v547
    %v549 = vadd.f32 %v548, 1.0
    %v550 = vrcp.pop %v549
    %v551 = vmul.f32 1.0, %v550
    %v552 = vtanh.pop %v545
    %v553 = vmul.f32 %v551, %v400
    %555 = vrot.lane.b32.xlu0 %v552, 32
    %v556 = vpop.permute.xlu0 %555
    %v558 = vmul.f32 %v551, %v556
    %560 = vrot.lane.b32.xlu0 %v558, 32
    %v561 = vpop.permute.xlu0 %560
    %v563 = vadd.f32 %v553, %v561
    %v564 = vtanh.pop %v563
    %566 = vrot.lane.b32.xlu0 %v564, 32
    %v567 = vpop.permute.xlu0 %566
    %v569 = vmul.f32 %v551, %v567
    %571 = vrot.lane.b32.xlu0 %v493, 64
    %v572 = vpop.permute.xlu0 %571
    %s574 = scalar_lea.vmem %s7, 8
    %575 = vst.msk [vmem:[%s574] sm:$0xff] %vm245, %v572
    %577 = vrot.lane.b32.xlu0 %v569, 64
    %v578 = vpop.permute.xlu0 %577
    %s580 = scalar_lea.vmem [#allocation3], 48
    %581 = vst.msk [vmem:[%s580] sm:$0xff] %vm245, %v578
    %s582 = smul.u32 2, 2
    %s583 = smul.addr %s582, 8
    %s584 = scalar_lea.vmem [#allocation2], %s583
    %v585 = vld [vmem:[%s584] sm:$0xff]
    %v586 = vpack.c.bf16 %v493, %v493
    %588 = vrot.lane.b32.xlu0 %v586, 64
    %v589 = vpop.permute.xlu0 %588
    %v591 = vsel %vm245, %v589, 0
    %593 = vmatprep.subr.bf16.mxu0 0
    %594 = vmatpush1.bf16.msra.mxu0 %v241
    %595 = vmatprep.subr.bf16.mxu0 0
    %596 = vmatpush1.bf16.msra.mxu0 %v242
    %597 = vmatprep.subr.bf16.mxu0 0
    %598 = vmatpush1.bf16.msra.mxu0 0
    %599 = vmatprep.subr.bf16.mxu0 0
    %600 = vmatpush1.bf16.msra.mxu0 0
    %601 = vmatprep.subr.bf16.mxu0 0
    %602 = vmatpush1.bf16.msra.mxu0 0
    %603 = vmatprep.subr.bf16.mxu0 0
    %604 = vmatpush1.bf16.msra.mxu0 0
    %605 = vmatprep.subr.bf16.mxu0 0
    %606 = vmatpush1.bf16.msra.mxu0 0
    %607 = vmatprep.subr.bf16.mxu0 0
    %608 = vmatpush1.bf16.msra.mxu0 0
    %609 = vmatprep.subr.bf16.mxu0 0
    %610 = vmatpush1.bf16.msra.mxu0 0
    %611 = vmatprep.subr.bf16.mxu0 0
    %612 = vmatpush1.bf16.msra.mxu0 0
    %613 = vmatprep.subr.bf16.mxu0 0
    %614 = vmatpush1.bf16.msra.mxu0 0
    %615 = vmatprep.subr.bf16.mxu0 0
    %616 = vmatpush1.bf16.msra.mxu0 0
    %617 = vmatprep.subr.bf16.mxu0 0
    %618 = vmatpush1.bf16.msra.mxu0 0
    %619 = vmatprep.subr.bf16.mxu0 0
    %620 = vmatpush1.bf16.msra.mxu0 0
    %621 = vmatprep.subr.bf16.mxu0 0
    %622 = vmatpush1.bf16.msra.mxu0 0
    %623 = vmatprep.subr.bf16.mxu0 0
    %624 = vmatpush1.bf16.msra.mxu0 0
    %625 = vmatprep.mubr.bf16.mxu0 0
    %626 = vmatmul.mubr.bf16.gmra.mrb[0].mxu0 %v591
    %v627 = vpop.f32.mrb[0].mxu0
    %v628 = vadd.f32 0.0, %v627
    %v629 = vpop.f32.mrb[0].mxu0
    %v630 = vpop.f32.mrb[0].mxu0
    %v631 = vpop.f32.mrb[0].mxu0
    %632 = vdwg.mxu0
    %v633 = vadd.f32 %v585, %v628
    %v634 = vxor.u32 %v633, 2147483648
    %v635 = vmul.f32 %v634, 1.442695
    %v636 = vpow.pop %v635
    %v637 = vadd.f32 %v636, 1.0
    %v638 = vrcp.pop %v637
    %v639 = vmul.f32 1.0, %v638
    %v640 = vtanh.pop %v633
    %v641 = vmul.f32 %v639, %v487
    %643 = vrot.lane.b32.xlu0 %v640, 32
    %v644 = vpop.permute.xlu0 %643
    %v646 = vmul.f32 %v639, %v644
    %648 = vrot.lane.b32.xlu0 %v646, 32
    %v649 = vpop.permute.xlu0 %648
    %v651 = vadd.f32 %v641, %v649
    %v652 = vtanh.pop %v651
    %654 = vrot.lane.b32.xlu0 %v652, 32
    %v655 = vpop.permute.xlu0 %654
    %v657 = vmul.f32 %v639, %v655
    %s658 = smul.u32 5, 2
    %s659 = smul.addr %s658, 8
    %s660 = scalar_lea.vmem [#allocation2], %s659
    %v661 = vld [vmem:[%s660 + $0x8] sm:$0xff]
    %v662 = vpack.c.bf16 %v569, %v569
    %664 = vrot.lane.b32.xlu0 %v662, 64
    %v665 = vpop.permute.xlu0 %664
    %v667 = vsel %vm245, %v665, 0
    %669 = vmatprep.subr.bf16.mxu0 0
    %670 = vmatpush1.bf16.msra.mxu0 %v331
    %671 = vmatprep.subr.bf16.mxu0 0
    %672 = vmatpush1.bf16.msra.mxu0 %v332
    %673 = vmatprep.subr.bf16.mxu0 0
    %674 = vmatpush1.bf16.msra.mxu0 0
    %675 = vmatprep.subr.bf16.mxu0 0
    %676 = vmatpush1.bf16.msra.mxu0 0
    %677 = vmatprep.subr.bf16.mxu0 0
    %678 = vmatpush1.bf16.msra.mxu0 0
    %679 = vmatprep.subr.bf16.mxu0 0
    %680 = vmatpush1.bf16.msra.mxu0 0
    %681 = vmatprep.subr.bf16.mxu0 0
    %682 = vmatpush1.bf16.msra.mxu0 0
    %683 = vmatprep.subr.bf16.mxu0 0
    %684 = vmatpush1.bf16.msra.mxu0 0
    %685 = vmatprep.subr.bf16.mxu0 0
    %686 = vmatpush1.bf16.msra.mxu0 0
    %687 = vmatprep.subr.bf16.mxu0 0
    %688 = vmatpush1.bf16.msra.mxu0 0
    %689 = vmatprep.subr.bf16.mxu0 0
    %690 = vmatpush1.bf16.msra.mxu0 0
    %691 = vmatprep.subr.bf16.mxu0 0
    %692 = vmatpush1.bf16.msra.mxu0 0
    %693 = vmatprep.subr.bf16.mxu0 0
    %694 = vmatpush1.bf16.msra.mxu0 0
    %695 = vmatprep.subr.bf16.mxu0 0
    %696 = vmatpush1.bf16.msra.mxu0 0
    %697 = vmatprep.subr.bf16.mxu0 0
    %698 = vmatpush1.bf16.msra.mxu0 0
    %699 = vmatprep.subr.bf16.mxu0 0
    %700 = vmatpush1.bf16.msra.mxu0 0
    %701 = vmatprep.mubr.bf16.mxu0 0
    %702 = vmatmul.mubr.bf16.gmra.mrb[0].mxu0 %v667
    %v703 = vpop.f32.mrb[0].mxu0
    %v704 = vadd.f32 0.0, %v703
    %v705 = vpop.f32.mrb[0].mxu0
    %v706 = vpop.f32.mrb[0].mxu0
    %v707 = vpop.f32.mrb[0].mxu0
    %708 = vdwg.mxu0
    %v709 = vadd.f32 %v661, %v704
    %v710 = vxor.u32 %v709, 2147483648
    %v711 = vmul.f32 %v710, 1.442695
    %v712 = vpow.pop %v711
    %v713 = vadd.f32 %v712, 1.0
    %v714 = vrcp.pop %v713
    %v715 = vmul.f32 1.0, %v714
    %v716 = vtanh.pop %v709
    %v717 = vmul.f32 %v715, %v563
    %719 = vrot.lane.b32.xlu0 %v716, 32
    %v720 = vpop.permute.xlu0 %719
    %v722 = vmul.f32 %v715, %v720
    %724 = vrot.lane.b32.xlu0 %v722, 32
    %v725 = vpop.permute.xlu0 %724
    %v727 = vadd.f32 %v717, %v725
    %v728 = vtanh.pop %v727
    %730 = vrot.lane.b32.xlu0 %v728, 32
    %v731 = vpop.permute.xlu0 %730
    %v733 = vmul.f32 %v715, %v731
    %735 = vrot.lane.b32.xlu0 %v657, 64
    %v736 = vpop.permute.xlu0 %735
    %s738 = scalar_lea.vmem %s7, 16
    %739 = vst.msk [vmem:[%s738] sm:$0xff] %vm245, %v736
    %741 = vrot.lane.b32.xlu0 %v733, 64
    %v742 = vpop.permute.xlu0 %741
    %s744 = scalar_lea.vmem [#allocation3], 40
    %745 = vst.msk [vmem:[%s744] sm:$0xff] %vm245, %v742
    %s746 = smul.u32 3, 2
    %s747 = smul.addr %s746, 8
    %s748 = scalar_lea.vmem [#allocation2], %s747
    %v749 = vld [vmem:[%s748] sm:$0xff]
    %v750 = vpack.c.bf16 %v657, %v657
    %752 = vrot.lane.b32.xlu0 %v750, 64
    %v753 = vpop.permute.xlu0 %752
    %v755 = vsel %vm245, %v753, 0
    %757 = vmatprep.subr.bf16.mxu0 0
    %758 = vmatpush1.bf16.msra.mxu0 %v241
    %759 = vmatprep.subr.bf16.mxu0 0
    %760 = vmatpush1.bf16.msra.mxu0 %v242
    %761 = vmatprep.subr.bf16.mxu0 0
    %762 = vmatpush1.bf16.msra.mxu0 0
    %763 = vmatprep.subr.bf16.mxu0 0
    %764 = vmatpush1.bf16.msra.mxu0 0
    %765 = vmatprep.subr.bf16.mxu0 0
    %766 = vmatpush1.bf16.msra.mxu0 0
    %767 = vmatprep.subr.bf16.mxu0 0
    %768 = vmatpush1.bf16.msra.mxu0 0
    %769 = vmatprep.subr.bf16.mxu0 0
    %770 = vmatpush1.bf16.msra.mxu0 0
    %771 = vmatprep.subr.bf16.mxu0 0
    %772 = vmatpush1.bf16.msra.mxu0 0
    %773 = vmatprep.subr.bf16.mxu0 0
    %774 = vmatpush1.bf16.msra.mxu0 0
    %775 = vmatprep.subr.bf16.mxu0 0
    %776 = vmatpush1.bf16.msra.mxu0 0
    %777 = vmatprep.subr.bf16.mxu0 0
    %778 = vmatpush1.bf16.msra.mxu0 0
    %779 = vmatprep.subr.bf16.mxu0 0
    %780 = vmatpush1.bf16.msra.mxu0 0
    %781 = vmatprep.subr.bf16.mxu0 0
    %782 = vmatpush1.bf16.msra.mxu0 0
    %783 = vmatprep.subr.bf16.mxu0 0
    %784 = vmatpush1.bf16.msra.mxu0 0
    %785 = vmatprep.subr.bf16.mxu0 0
    %786 = vmatpush1.bf16.msra.mxu0 0
    %787 = vmatprep.subr.bf16.mxu0 0
    %788 = vmatpush1.bf16.msra.mxu0 0
    %789 = vmatprep.mubr.bf16.mxu0 0
    %790 = vmatmul.mubr.bf16.gmra.mrb[0].mxu0 %v755
    %v791 = vpop.f32.mrb[0].mxu0
    %v792 = vadd.f32 0.0, %v791
    %v793 = vpop.f32.mrb[0].mxu0
    %v794 = vpop.f32.mrb[0].mxu0
    %v795 = vpop.f32.mrb[0].mxu0
    %796 = vdwg.mxu0
    %v797 = vadd.f32 %v749, %v792
    %v798 = vxor.u32 %v797, 2147483648
    %v799 = vmul.f32 %v798, 1.442695
    %v800 = vpow.pop %v799
    %v801 = vadd.f32 %v800, 1.0
    %v802 = vrcp.pop %v801
    %v803 = vmul.f32 1.0, %v802
    %v804 = vtanh.pop %v797
    %v805 = vmul.f32 %v803, %v651
    %807 = vrot.lane.b32.xlu0 %v804, 32
    %v808 = vpop.permute.xlu0 %807
    %v810 = vmul.f32 %v803, %v808
    %812 = vrot.lane.b32.xlu0 %v810, 32
    %v813 = vpop.permute.xlu0 %812
    %v815 = vadd.f32 %v805, %v813
    %v816 = vtanh.pop %v815
    %818 = vrot.lane.b32.xlu0 %v816, 32
    %v819 = vpop.permute.xlu0 %818
    %v821 = vmul.f32 %v803, %v819
    %s822 = smul.u32 4, 2
    %s823 = smul.addr %s822, 8
    %s824 = scalar_lea.vmem [#allocation2], %s823
    %v825 = vld [vmem:[%s824 + $0x8] sm:$0xff]
    %v826 = vpack.c.bf16 %v733, %v733
    %828 = vrot.lane.b32.xlu0 %v826, 64
    %v829 = vpop.permute.xlu0 %828
    %v831 = vsel %vm245, %v829, 0
    %833 = vmatprep.subr.bf16.mxu0 0
    %834 = vmatpush1.bf16.msra.mxu0 %v331
    %835 = vmatprep.subr.bf16.mxu0 0
    %836 = vmatpush1.bf16.msra.mxu0 %v332
    %837 = vmatprep.subr.bf16.mxu0 0
    %838 = vmatpush1.bf16.msra.mxu0 0
    %839 = vmatprep.subr.bf16.mxu0 0
    %840 = vmatpush1.bf16.msra.mxu0 0
    %841 = vmatprep.subr.bf16.mxu0 0
    %842 = vmatpush1.bf16.msra.mxu0 0
    %843 = vmatprep.subr.bf16.mxu0 0
    %844 = vmatpush1.bf16.msra.mxu0 0
    %845 = vmatprep.subr.bf16.mxu0 0
    %846 = vmatpush1.bf16.msra.mxu0 0
    %847 = vmatprep.subr.bf16.mxu0 0
    %848 = vmatpush1.bf16.msra.mxu0 0
    %849 = vmatprep.subr.bf16.mxu0 0
    %850 = vmatpush1.bf16.msra.mxu0 0
    %851 = vmatprep.subr.bf16.mxu0 0
    %852 = vmatpush1.bf16.msra.mxu0 0
    %853 = vmatprep.subr.bf16.mxu0 0
    %854 = vmatpush1.bf16.msra.mxu0 0
    %855 = vmatprep.subr.bf16.mxu0 0
    %856 = vmatpush1.bf16.msra.mxu0 0
    %857 = vmatprep.subr.bf16.mxu0 0
    %858 = vmatpush1.bf16.msra.mxu0 0
    %859 = vmatprep.subr.bf16.mxu0 0
    %860 = vmatpush1.bf16.msra.mxu0 0
    %861 = vmatprep.subr.bf16.mxu0 0
    %862 = vmatpush1.bf16.msra.mxu0 0
    %863 = vmatprep.subr.bf16.mxu0 0
    %864 = vmatpush1.bf16.msra.mxu0 0
    %865 = vmatprep.mubr.bf16.mxu0 0
    %866 = vmatmul.mubr.bf16.gmra.mrb[0].mxu0 %v831
    %v867 = vpop.f32.mrb[0].mxu0
    %v868 = vadd.f32 0.0, %v867
    %v869 = vpop.f32.mrb[0].mxu0
    %v870 = vpop.f32.mrb[0].mxu0
    %v871 = vpop.f32.mrb[0].mxu0
    %872 = vdwg.mxu0
    %v873 = vadd.f32 %v825, %v868
    %v874 = vxor.u32 %v873, 2147483648
    %v875 = vmul.f32 %v874, 1.442695
    %v876 = vpow.pop %v875
    %v877 = vadd.f32 %v876, 1.0
    %v878 = vrcp.pop %v877
    %v879 = vmul.f32 1.0, %v878
    %v880 = vtanh.pop %v873
    %v881 = vmul.f32 %v879, %v727
    %883 = vrot.lane.b32.xlu0 %v880, 32
    %v884 = vpop.permute.xlu0 %883
    %v886 = vmul.f32 %v879, %v884
    %888 = vrot.lane.b32.xlu0 %v886, 32
    %v889 = vpop.permute.xlu0 %888
    %v891 = vadd.f32 %v881, %v889
    %v892 = vtanh.pop %v891
    %894 = vrot.lane.b32.xlu0 %v892, 32
    %v895 = vpop.permute.xlu0 %894
    %v897 = vmul.f32 %v879, %v895
    %899 = vrot.lane.b32.xlu0 %v821, 64
    %v900 = vpop.permute.xlu0 %899
    %s902 = scalar_lea.vmem %s7, 24
    %903 = vst.msk [vmem:[%s902] sm:$0xff] %vm245, %v900
    %905 = vrot.lane.b32.xlu0 %v897, 64
    %v906 = vpop.permute.xlu0 %905
    %s908 = scalar_lea.vmem [#allocation3], 32
    %909 = vst.msk [vmem:[%s908] sm:$0xff] %vm245, %v906
    %v910 = vld [vmem:[%s824] sm:$0xff]
    %v911 = vpack.c.bf16 %v821, %v821
    %913 = vrot.lane.b32.xlu0 %v911, 64
    %v914 = vpop.permute.xlu0 %913
    %v916 = vsel %vm245, %v914, 0
    %918 = vmatprep.subr.bf16.mxu0 0
    %919 = vmatpush1.bf16.msra.mxu0 %v241
    %920 = vmatprep.subr.bf16.mxu0 0
    %921 = vmatpush1.bf16.msra.mxu0 %v242
    %922 = vmatprep.subr.bf16.mxu0 0
    %923 = vmatpush1.bf16.msra.mxu0 0
    %924 = vmatprep.subr.bf16.mxu0 0
    %925 = vmatpush1.bf16.msra.mxu0 0
    %926 = vmatprep.subr.bf16.mxu0 0
    %927 = vmatpush1.bf16.msra.mxu0 0
    %928 = vmatprep.subr.bf16.mxu0 0
    %929 = vmatpush1.bf16.msra.mxu0 0
    %930 = vmatprep.subr.bf16.mxu0 0
    %931 = vmatpush1.bf16.msra.mxu0 0
    %932 = vmatprep.subr.bf16.mxu0 0
    %933 = vmatpush1.bf16.msra.mxu0 0
    %934 = vmatprep.subr.bf16.mxu0 0
    %935 = vmatpush1.bf16.msra.mxu0 0
    %936 = vmatprep.subr.bf16.mxu0 0
    %937 = vmatpush1.bf16.msra.mxu0 0
    %938 = vmatprep.subr.bf16.mxu0 0
    %939 = vmatpush1.bf16.msra.mxu0 0
    %940 = vmatprep.subr.bf16.mxu0 0
    %941 = vmatpush1.bf16.msra.mxu0 0
    %942 = vmatprep.subr.bf16.mxu0 0
    %943 = vmatpush1.bf16.msra.mxu0 0
    %944 = vmatprep.subr.bf16.mxu0 0
    %945 = vmatpush1.bf16.msra.mxu0 0
    %946 = vmatprep.subr.bf16.mxu0 0
    %947 = vmatpush1.bf16.msra.mxu0 0
    %948 = vmatprep.subr.bf16.mxu0 0
    %949 = vmatpush1.bf16.msra.mxu0 0
    %950 = vmatprep.mubr.bf16.mxu0 0
    %951 = vmatmul.mubr.bf16.gmra.mrb[0].mxu0 %v916
    %v952 = vpop.f32.mrb[0].mxu0
    %v953 = vadd.f32 0.0, %v952
    %v954 = vpop.f32.mrb[0].mxu0
    %v955 = vpop.f32.mrb[0].mxu0
    %v956 = vpop.f32.mrb[0].mxu0
    %957 = vdwg.mxu0
    %v958 = vadd.f32 %v910, %v953
    %v959 = vxor.u32 %v958, 2147483648
    %v960 = vmul.f32 %v959, 1.442695
    %v961 = vpow.pop %v960
    %v962 = vadd.f32 %v961, 1.0
    %v963 = vrcp.pop %v962
    %v964 = vmul.f32 1.0, %v963
    %v965 = vtanh.pop %v958
    %v966 = vmul.f32 %v964, %v815
    %968 = vrot.lane.b32.xlu0 %v965, 32
    %v969 = vpop.permute.xlu0 %968
    %v971 = vmul.f32 %v964, %v969
    %973 = vrot.lane.b32.xlu0 %v971, 32
    %v974 = vpop.permute.xlu0 %973
    %v976 = vadd.f32 %v966, %v974
    %v977 = vtanh.pop %v976
    %979 = vrot.lane.b32.xlu0 %v977, 32
    %v980 = vpop.permute.xlu0 %979
    %v982 = vmul.f32 %v964, %v980
    %v983 = vld [vmem:[%s748 + $0x8] sm:$0xff]
    %v984 = vpack.c.bf16 %v897, %v897
    %986 = vrot.lane.b32.xlu0 %v984, 64
    %v987 = vpop.permute.xlu0 %986
    %v989 = vsel %vm245, %v987, 0
    %991 = vmatprep.subr.bf16.mxu0 0
    %992 = vmatpush1.bf16.msra.mxu0 %v331
    %993 = vmatprep.subr.bf16.mxu0 0
    %994 = vmatpush1.bf16.msra.mxu0 %v332
    %995 = vmatprep.subr.bf16.mxu0 0
    %996 = vmatpush1.bf16.msra.mxu0 0
    %997 = vmatprep.subr.bf16.mxu0 0
    %998 = vmatpush1.bf16.msra.mxu0 0
    %999 = vmatprep.subr.bf16.mxu0 0
    %1000 = vmatpush1.bf16.msra.mxu0 0
    %1001 = vmatprep.subr.bf16.mxu0 0
    %1002 = vmatpush1.bf16.msra.mxu0 0
    %1003 = vmatprep.subr.bf16.mxu0 0
    %1004 = vmatpush1.bf16.msra.mxu0 0
    %1005 = vmatprep.subr.bf16.mxu0 0
    %1006 = vmatpush1.bf16.msra.mxu0 0
    %1007 = vmatprep.subr.bf16.mxu0 0
    %1008 = vmatpush1.bf16.msra.mxu0 0
    %1009 = vmatprep.subr.bf16.mxu0 0
    %1010 = vmatpush1.bf16.msra.mxu0 0
    %1011 = vmatprep.subr.bf16.mxu0 0
    %1012 = vmatpush1.bf16.msra.mxu0 0
    %1013 = vmatprep.subr.bf16.mxu0 0
    %1014 = vmatpush1.bf16.msra.mxu0 0
    %1015 = vmatprep.subr.bf16.mxu0 0
    %1016 = vmatpush1.bf16.msra.mxu0 0
    %1017 = vmatprep.subr.bf16.mxu0 0
    %1018 = vmatpush1.bf16.msra.mxu0 0
    %1019 = vmatprep.subr.bf16.mxu0 0
    %1020 = vmatpush1.bf16.msra.mxu0 0
    %1021 = vmatprep.subr.bf16.mxu0 0
    %1022 = vmatpush1.bf16.msra.mxu0 0
    %1023 = vmatprep.mubr.bf16.mxu0 0
    %1024 = vmatmul.mubr.bf16.gmra.mrb[0].mxu0 %v989
    %v1025 = vpop.f32.mrb[0].mxu0
    %v1026 = vadd.f32 0.0, %v1025
    %v1027 = vpop.f32.mrb[0].mxu0
    %v1028 = vpop.f32.mrb[0].mxu0
    %v1029 = vpop.f32.mrb[0].mxu0
    %1030 = vdwg.mxu0
    %v1031 = vadd.f32 %v983, %v1026
    %v1032 = vxor.u32 %v1031, 2147483648
    %v1033 = vmul.f32 %v1032, 1.442695
    %v1034 = vpow.pop %v1033
    %v1035 = vadd.f32 %v1034, 1.0
    %v1036 = vrcp.pop %v1035
    %v1037 = vmul.f32 1.0, %v1036
    %v1038 = vtanh.pop %v1031
    %v1039 = vmul.f32 %v1037, %v891
    %1041 = vrot.lane.b32.xlu0 %v1038, 32
    %v1042 = vpop.permute.xlu0 %1041
    %v1044 = vmul.f32 %v1037, %v1042
    %1046 = vrot.lane.b32.xlu0 %v1044, 32
    %v1047 = vpop.permute.xlu0 %1046
    %v1049 = vadd.f32 %v1039, %v1047
    %v1050 = vtanh.pop %v1049
    %1052 = vrot.lane.b32.xlu0 %v1050, 32
    %v1053 = vpop.permute.xlu0 %1052
    %v1055 = vmul.f32 %v1037, %v1053
    %1057 = vrot.lane.b32.xlu0 %v982, 64
    %v1058 = vpop.permute.xlu0 %1057
    %s1060 = scalar_lea.vmem %s7, 32
    %1061 = vst.msk [vmem:[%s1060] sm:$0xff] %vm245, %v1058
    %1063 = vrot.lane.b32.xlu0 %v1055, 64
    %v1064 = vpop.permute.xlu0 %1063
    %s1066 = scalar_lea.vmem [#allocation3], 24
    %1067 = vst.msk [vmem:[%s1066] sm:$0xff] %vm245, %v1064
    %v1068 = vld [vmem:[%s660] sm:$0xff]
    %v1069 = vpack.c.bf16 %v982, %v982
    %1071 = vrot.lane.b32.xlu0 %v1069, 64
    %v1072 = vpop.permute.xlu0 %1071
    %v1074 = vsel %vm245, %v1072, 0
    %1076 = vmatprep.subr.bf16.mxu0 0
    %1077 = vmatpush1.bf16.msra.mxu0 %v241
    %1078 = vmatprep.subr.bf16.mxu0 0
    %1079 = vmatpush1.bf16.msra.mxu0 %v242
    %1080 = vmatprep.subr.bf16.mxu0 0
    %1081 = vmatpush1.bf16.msra.mxu0 0
    %1082 = vmatprep.subr.bf16.mxu0 0
    %1083 = vmatpush1.bf16.msra.mxu0 0
    %1084 = vmatprep.subr.bf16.mxu0 0
    %1085 = vmatpush1.bf16.msra.mxu0 0
    %1086 = vmatprep.subr.bf16.mxu0 0
    %1087 = vmatpush1.bf16.msra.mxu0 0
    %1088 = vmatprep.subr.bf16.mxu0 0
    %1089 = vmatpush1.bf16.msra.mxu0 0
    %1090 = vmatprep.subr.bf16.mxu0 0
    %1091 = vmatpush1.bf16.msra.mxu0 0
    %1092 = vmatprep.subr.bf16.mxu0 0
    %1093 = vmatpush1.bf16.msra.mxu0 0
    %1094 = vmatprep.subr.bf16.mxu0 0
    %1095 = vmatpush1.bf16.msra.mxu0 0
    %1096 = vmatprep.subr.bf16.mxu0 0
    %1097 = vmatpush1.bf16.msra.mxu0 0
    %1098 = vmatprep.subr.bf16.mxu0 0
    %1099 = vmatpush1.bf16.msra.mxu0 0
    %1100 = vmatprep.subr.bf16.mxu0 0
    %1101 = vmatpush1.bf16.msra.mxu0 0
    %1102 = vmatprep.subr.bf16.mxu0 0
    %1103 = vmatpush1.bf16.msra.mxu0 0
    %1104 = vmatprep.subr.bf16.mxu0 0
    %1105 = vmatpush1.bf16.msra.mxu0 0
    %1106 = vmatprep.subr.bf16.mxu0 0
    %1107 = vmatpush1.bf16.msra.mxu0 0
    %1108 = vmatprep.mubr.bf16.mxu0 0
    %1109 = vmatmul.mubr.bf16.gmra.mrb[0].mxu0 %v1074
    %v1110 = vpop.f32.mrb[0].mxu0
    %v1111 = vadd.f32 0.0, %v1110
    %v1112 = vpop.f32.mrb[0].mxu0
    %v1113 = vpop.f32.mrb[0].mxu0
    %v1114 = vpop.f32.mrb[0].mxu0
    %1115 = vdwg.mxu0
    %v1116 = vadd.f32 %v1068, %v1111
    %v1117 = vxor.u32 %v1116, 2147483648
    %v1118 = vmul.f32 %v1117, 1.442695
    %v1119 = vpow.pop %v1118
    %v1120 = vadd.f32 %v1119, 1.0
    %v1121 = vrcp.pop %v1120
    %v1122 = vmul.f32 1.0, %v1121
    %v1123 = vtanh.pop %v1116
    %v1124 = vmul.f32 %v1122, %v976
    %1126 = vrot.lane.b32.xlu0 %v1123, 32
    %v1127 = vpop.permute.xlu0 %1126
    %v1129 = vmul.f32 %v1122, %v1127
    %1131 = vrot.lane.b32.xlu0 %v1129, 32
    %v1132 = vpop.permute.xlu0 %1131
    %v1134 = vadd.f32 %v1124, %v1132
    %v1135 = vtanh.pop %v1134
    %1137 = vrot.lane.b32.xlu0 %v1135, 32
    %v1138 = vpop.permute.xlu0 %1137
    %v1140 = vmul.f32 %v1122, %v1138
    %v1141 = vld [vmem:[%s584 + $0x8] sm:$0xff]
    %v1142 = vpack.c.bf16 %v1055, %v1055
    %1144 = vrot.lane.b32.xlu0 %v1142, 64
    %v1145 = vpop.permute.xlu0 %1144
    %v1147 = vsel %vm245, %v1145, 0
    %1149 = vmatprep.subr.bf16.mxu0 0
    %1150 = vmatpush1.bf16.msra.mxu0 %v331
    %1151 = vmatprep.subr.bf16.mxu0 0
    %1152 = vmatpush1.bf16.msra.mxu0 %v332
    %1153 = vmatprep.subr.bf16.mxu0 0
    %1154 = vmatpush1.bf16.msra.mxu0 0
    %1155 = vmatprep.subr.bf16.mxu0 0
    %1156 = vmatpush1.bf16.msra.mxu0 0
    %1157 = vmatprep.subr.bf16.mxu0 0
    %1158 = vmatpush1.bf16.msra.mxu0 0
    %1159 = vmatprep.subr.bf16.mxu0 0
    %1160 = vmatpush1.bf16.msra.mxu0 0
    %1161 = vmatprep.subr.bf16.mxu0 0
    %1162 = vmatpush1.bf16.msra.mxu0 0
    %1163 = vmatprep.subr.bf16.mxu0 0
    %1164 = vmatpush1.bf16.msra.mxu0 0
    %1165 = vmatprep.subr.bf16.mxu0 0
    %1166 = vmatpush1.bf16.msra.mxu0 0
    %1167 = vmatprep.subr.bf16.mxu0 0
    %1168 = vmatpush1.bf16.msra.mxu0 0
    %1169 = vmatprep.subr.bf16.mxu0 0
    %1170 = vmatpush1.bf16.msra.mxu0 0
    %1171 = vmatprep.subr.bf16.mxu0 0
    %1172 = vmatpush1.bf16.msra.mxu0 0
    %1173 = vmatprep.subr.bf16.mxu0 0
    %1174 = vmatpush1.bf16.msra.mxu0 0
    %1175 = vmatprep.subr.bf16.mxu0 0
    %1176 = vmatpush1.bf16.msra.mxu0 0
    %1177 = vmatprep.subr.bf16.mxu0 0
    %1178 = vmatpush1.bf16.msra.mxu0 0
    %1179 = vmatprep.subr.bf16.mxu0 0
    %1180 = vmatpush1.bf16.msra.mxu0 0
    %1181 = vmatprep.mubr.bf16.mxu0 0
    %1182 = vmatmul.mubr.bf16.gmra.mrb[0].mxu0 %v1147
    %v1183 = vpop.f32.mrb[0].mxu0
    %v1184 = vadd.f32 0.0, %v1183
    %v1185 = vpop.f32.mrb[0].mxu0
    %v1186 = vpop.f32.mrb[0].mxu0
    %v1187 = vpop.f32.mrb[0].mxu0
    %1188 = vdwg.mxu0
    %v1189 = vadd.f32 %v1141, %v1184
    %v1190 = vxor.u32 %v1189, 2147483648
    %v1191 = vmul.f32 %v1190, 1.442695
    %v1192 = vpow.pop %v1191
    %v1193 = vadd.f32 %v1192, 1.0
    %v1194 = vrcp.pop %v1193
    %v1195 = vmul.f32 1.0, %v1194
    %v1196 = vtanh.pop %v1189
    %v1197 = vmul.f32 %v1195, %v1049
    %1199 = vrot.lane.b32.xlu0 %v1196, 32
    %v1200 = vpop.permute.xlu0 %1199
    %v1202 = vmul.f32 %v1195, %v1200
    %1204 = vrot.lane.b32.xlu0 %v1202, 32
    %v1205 = vpop.permute.xlu0 %1204
    %v1207 = vadd.f32 %v1197, %v1205
    %v1208 = vtanh.pop %v1207
    %1210 = vrot.lane.b32.xlu0 %v1208, 32
    %v1211 = vpop.permute.xlu0 %1210
    %v1213 = vmul.f32 %v1195, %v1211
    %1215 = vrot.lane.b32.xlu0 %v1140, 64
    %v1216 = vpop.permute.xlu0 %1215
    %s1218 = scalar_lea.vmem %s7, 40
    %1219 = vst.msk [vmem:[%s1218] sm:$0xff] %vm245, %v1216
    %1221 = vrot.lane.b32.xlu0 %v1213, 64
    %v1222 = vpop.permute.xlu0 %1221
    %s1224 = scalar_lea.vmem [#allocation3], 16
    %1225 = vst.msk [vmem:[%s1224] sm:$0xff] %vm245, %v1222
    %v1226 = vld [vmem:[%s496] sm:$0xff]
    %v1227 = vpack.c.bf16 %v1140, %v1140
    %1229 = vrot.lane.b32.xlu0 %v1227, 64
    %v1230 = vpop.permute.xlu0 %1229
    %v1232 = vsel %vm245, %v1230, 0
    %1234 = vmatprep.subr.bf16.mxu0 0
    %1235 = vmatpush1.bf16.msra.mxu0 %v241
    %1236 = vmatprep.subr.bf16.mxu0 0
    %1237 = vmatpush1.bf16.msra.mxu0 %v242
    %1238 = vmatprep.subr.bf16.mxu0 0
    %1239 = vmatpush1.bf16.msra.mxu0 0
    %1240 = vmatprep.subr.bf16.mxu0 0
    %1241 = vmatpush1.bf16.msra.mxu0 0
    %1242 = vmatprep.subr.bf16.mxu0 0
    %1243 = vmatpush1.bf16.msra.mxu0 0
    %1244 = vmatprep.subr.bf16.mxu0 0
    %1245 = vmatpush1.bf16.msra.mxu0 0
    %1246 = vmatprep.subr.bf16.mxu0 0
    %1247 = vmatpush1.bf16.msra.mxu0 0
    %1248 = vmatprep.subr.bf16.mxu0 0
    %1249 = vmatpush1.bf16.msra.mxu0 0
    %1250 = vmatprep.subr.bf16.mxu0 0
    %1251 = vmatpush1.bf16.msra.mxu0 0
    %1252 = vmatprep.subr.bf16.mxu0 0
    %1253 = vmatpush1.bf16.msra.mxu0 0
    %1254 = vmatprep.subr.bf16.mxu0 0
    %1255 = vmatpush1.bf16.msra.mxu0 0
    %1256 = vmatprep.subr.bf16.mxu0 0
    %1257 = vmatpush1.bf16.msra.mxu0 0
    %1258 = vmatprep.subr.bf16.mxu0 0
    %1259 = vmatpush1.bf16.msra.mxu0 0
    %1260 = vmatprep.subr.bf16.mxu0 0
    %1261 = vmatpush1.bf16.msra.mxu0 0
    %1262 = vmatprep.subr.bf16.mxu0 0
    %1263 = vmatpush1.bf16.msra.mxu0 0
    %1264 = vmatprep.subr.bf16.mxu0 0
    %1265 = vmatpush1.bf16.msra.mxu0 0
    %1266 = vmatprep.mubr.bf16.mxu0 0
    %1267 = vmatmul.mubr.bf16.gmra.mrb[0].mxu0 %v1232
    %v1268 = vpop.f32.mrb[0].mxu0
    %v1269 = vadd.f32 0.0, %v1268
    %v1270 = vpop.f32.mrb[0].mxu0
    %v1271 = vpop.f32.mrb[0].mxu0
    %v1272 = vpop.f32.mrb[0].mxu0
    %1273 = vdwg.mxu0
    %v1274 = vadd.f32 %v1226, %v1269
    %v1275 = vxor.u32 %v1274, 2147483648
    %v1276 = vmul.f32 %v1275, 1.442695
    %v1277 = vpow.pop %v1276
    %v1278 = vadd.f32 %v1277, 1.0
    %v1279 = vrcp.pop %v1278
    %v1280 = vmul.f32 1.0, %v1279
    %v1281 = vtanh.pop %v1274
    %v1282 = vmul.f32 %v1280, %v1134
    %1284 = vrot.lane.b32.xlu0 %v1281, 32
    %v1285 = vpop.permute.xlu0 %1284
    %v1287 = vmul.f32 %v1280, %v1285
    %1289 = vrot.lane.b32.xlu0 %v1287, 32
    %v1290 = vpop.permute.xlu0 %1289
    %v1292 = vadd.f32 %v1282, %v1290
    %v1293 = vtanh.pop %v1292
    %1295 = vrot.lane.b32.xlu0 %v1293, 32
    %v1296 = vpop.permute.xlu0 %1295
    %v1298 = vmul.f32 %v1280, %v1296
    %v1299 = vld [vmem:[%s420 + $0x8] sm:$0xff]
    %v1300 = vpack.c.bf16 %v1213, %v1213
    %1302 = vrot.lane.b32.xlu0 %v1300, 64
    %v1303 = vpop.permute.xlu0 %1302
    %v1305 = vsel %vm245, %v1303, 0
    %1307 = vmatprep.subr.bf16.mxu0 0
    %1308 = vmatpush1.bf16.msra.mxu0 %v331
    %1309 = vmatprep.subr.bf16.mxu0 0
    %1310 = vmatpush1.bf16.msra.mxu0 %v332
    %1311 = vmatprep.subr.bf16.mxu0 0
    %1312 = vmatpush1.bf16.msra.mxu0 0
    %1313 = vmatprep.subr.bf16.mxu0 0
    %1314 = vmatpush1.bf16.msra.mxu0 0
    %1315 = vmatprep.subr.bf16.mxu0 0
    %1316 = vmatpush1.bf16.msra.mxu0 0
    %1317 = vmatprep.subr.bf16.mxu0 0
    %1318 = vmatpush1.bf16.msra.mxu0 0
    %1319 = vmatprep.subr.bf16.mxu0 0
    %1320 = vmatpush1.bf16.msra.mxu0 0
    %1321 = vmatprep.subr.bf16.mxu0 0
    %1322 = vmatpush1.bf16.msra.mxu0 0
    %1323 = vmatprep.subr.bf16.mxu0 0
    %1324 = vmatpush1.bf16.msra.mxu0 0
    %1325 = vmatprep.subr.bf16.mxu0 0
    %1326 = vmatpush1.bf16.msra.mxu0 0
    %1327 = vmatprep.subr.bf16.mxu0 0
    %1328 = vmatpush1.bf16.msra.mxu0 0
    %1329 = vmatprep.subr.bf16.mxu0 0
    %1330 = vmatpush1.bf16.msra.mxu0 0
    %1331 = vmatprep.subr.bf16.mxu0 0
    %1332 = vmatpush1.bf16.msra.mxu0 0
    %1333 = vmatprep.subr.bf16.mxu0 0
    %1334 = vmatpush1.bf16.msra.mxu0 0
    %1335 = vmatprep.subr.bf16.mxu0 0
    %1336 = vmatpush1.bf16.msra.mxu0 0
    %1337 = vmatprep.subr.bf16.mxu0 0
    %1338 = vmatpush1.bf16.msra.mxu0 0
    %1339 = vmatprep.mubr.bf16.mxu0 0
    %1340 = vmatmul.mubr.bf16.gmra.mrb[0].mxu0 %v1305
    %v1341 = vpop.f32.mrb[0].mxu0
    %v1342 = vadd.f32 0.0, %v1341
    %v1343 = vpop.f32.mrb[0].mxu0
    %v1344 = vpop.f32.mrb[0].mxu0
    %v1345 = vpop.f32.mrb[0].mxu0
    %1346 = vdwg.mxu0
    %v1347 = vadd.f32 %v1299, %v1342
    %v1348 = vxor.u32 %v1347, 2147483648
    %v1349 = vmul.f32 %v1348, 1.442695
    %v1350 = vpow.pop %v1349
    %v1351 = vadd.f32 %v1350, 1.0
    %v1352 = vrcp.pop %v1351
    %v1353 = vmul.f32 1.0, %v1352
    %v1354 = vtanh.pop %v1347
    %v1355 = vmul.f32 %v1353, %v1207
    %1357 = vrot.lane.b32.xlu0 %v1354, 32
    %v1358 = vpop.permute.xlu0 %1357
    %v1360 = vmul.f32 %v1353, %v1358
    %1362 = vrot.lane.b32.xlu0 %v1360, 32
    %v1363 = vpop.permute.xlu0 %1362
    %v1365 = vadd.f32 %v1355, %v1363
    %v1366 = vtanh.pop %v1365
    %1368 = vrot.lane.b32.xlu0 %v1366, 32
    %v1369 = vpop.permute.xlu0 %1368
    %v1371 = vmul.f32 %v1353, %v1369
    %1373 = vrot.lane.b32.xlu0 %v1298, 64
    %v1374 = vpop.permute.xlu0 %1373
    %s1376 = scalar_lea.vmem %s7, 48
    %1377 = vst.msk [vmem:[%s1376] sm:$0xff] %vm245, %v1374
    %1379 = vrot.lane.b32.xlu0 %v1371, 64
    %v1380 = vpop.permute.xlu0 %1379
    %s1382 = scalar_lea.vmem [#allocation3], 8
    %1383 = vst.msk [vmem:[%s1382] sm:$0xff] %vm245, %v1380
    %v1384 = vld [vmem:[%s320] sm:$0xff]
    %v1385 = vpack.c.bf16 %v1298, %v1298
    %1387 = vrot.lane.b32.xlu0 %v1385, 64
    %v1388 = vpop.permute.xlu0 %1387
    %v1390 = vsel %vm245, %v1388, 0
    %1392 = vmatprep.subr.bf16.mxu0 0
    %1393 = vmatpush1.bf16.msra.mxu0 %v241
    %1394 = vmatprep.subr.bf16.mxu0 0
    %1395 = vmatpush1.bf16.msra.mxu0 %v242
    %1396 = vmatprep.subr.bf16.mxu0 0
    %1397 = vmatpush1.bf16.msra.mxu0 0
    %1398 = vmatprep.subr.bf16.mxu0 0
    %1399 = vmatpush1.bf16.msra.mxu0 0
    %1400 = vmatprep.subr.bf16.mxu0 0
    %1401 = vmatpush1.bf16.msra.mxu0 0
    %1402 = vmatprep.subr.bf16.mxu0 0
    %1403 = vmatpush1.bf16.msra.mxu0 0
    %1404 = vmatprep.subr.bf16.mxu0 0
    %1405 = vmatpush1.bf16.msra.mxu0 0
    %1406 = vmatprep.subr.bf16.mxu0 0
    %1407 = vmatpush1.bf16.msra.mxu0 0
    %1408 = vmatprep.subr.bf16.mxu0 0
    %1409 = vmatpush1.bf16.msra.mxu0 0
    %1410 = vmatprep.subr.bf16.mxu0 0
    %1411 = vmatpush1.bf16.msra.mxu0 0
    %1412 = vmatprep.subr.bf16.mxu0 0
    %1413 = vmatpush1.bf16.msra.mxu0 0
    %1414 = vmatprep.subr.bf16.mxu0 0
    %1415 = vmatpush1.bf16.msra.mxu0 0
    %1416 = vmatprep.subr.bf16.mxu0 0
    %1417 = vmatpush1.bf16.msra.mxu0 0
    %1418 = vmatprep.subr.bf16.mxu0 0
    %1419 = vmatpush1.bf16.msra.mxu0 0
    %1420 = vmatprep.subr.bf16.mxu0 0
    %1421 = vmatpush1.bf16.msra.mxu0 0
    %1422 = vmatprep.subr.bf16.mxu0 0
    %1423 = vmatpush1.bf16.msra.mxu0 0
    %1424 = vmatprep.mubr.bf16.mxu0 0
    %1425 = vmatmul.mubr.bf16.gmra.mrb[0].mxu0 %v1390
    %v1426 = vpop.f32.mrb[0].mxu0
    %v1427 = vadd.f32 0.0, %v1426
    %v1428 = vpop.f32.mrb[0].mxu0
    %v1429 = vpop.f32.mrb[0].mxu0
    %v1430 = vpop.f32.mrb[0].mxu0
    %1431 = vdwg.mxu0
    %v1432 = vadd.f32 %v1384, %v1427
    %v1433 = vxor.u32 %v1432, 2147483648
    %v1434 = vmul.f32 %v1433, 1.442695
    %v1435 = vpow.pop %v1434
    %v1436 = vadd.f32 %v1435, 1.0
    %v1437 = vrcp.pop %v1436
    %v1438 = vmul.f32 1.0, %v1437
    %v1439 = vtanh.pop %v1432
    %v1440 = vmul.f32 %v1438, %v1292
    %1442 = vrot.lane.b32.xlu0 %v1439, 32
    %v1443 = vpop.permute.xlu0 %1442
    %v1445 = vmul.f32 %v1438, %v1443
    %1447 = vrot.lane.b32.xlu0 %v1445, 32
    %v1448 = vpop.permute.xlu0 %1447
    %v1450 = vadd.f32 %v1440, %v1448
    %v1451 = vtanh.pop %v1450
    %1453 = vrot.lane.b32.xlu0 %v1451, 32
    %v1454 = vpop.permute.xlu0 %1453
    %v1456 = vmul.f32 %v1438, %v1454
    %v1457 = vld [vmem:[%s230 + $0x8] sm:$0xff]
    %v1458 = vpack.c.bf16 %v1371, %v1371
    %1460 = vrot.lane.b32.xlu0 %v1458, 64
    %v1461 = vpop.permute.xlu0 %1460
    %v1463 = vsel %vm245, %v1461, 0
    %1465 = vmatprep.subr.bf16.mxu0 0
    %1466 = vmatpush1.bf16.msra.mxu0 %v331
    %1467 = vmatprep.subr.bf16.mxu0 0
    %1468 = vmatpush1.bf16.msra.mxu0 %v332
    %1469 = vmatprep.subr.bf16.mxu0 0
    %1470 = vmatpush1.bf16.msra.mxu0 0
    %1471 = vmatprep.subr.bf16.mxu0 0
    %1472 = vmatpush1.bf16.msra.mxu0 0
    %1473 = vmatprep.subr.bf16.mxu0 0
    %1474 = vmatpush1.bf16.msra.mxu0 0
    %1475 = vmatprep.subr.bf16.mxu0 0
    %1476 = vmatpush1.bf16.msra.mxu0 0
    %1477 = vmatprep.subr.bf16.mxu0 0
    %1478 = vmatpush1.bf16.msra.mxu0 0
    %1479 = vmatprep.subr.bf16.mxu0 0
    %1480 = vmatpush1.bf16.msra.mxu0 0
    %1481 = vmatprep.subr.bf16.mxu0 0
    %1482 = vmatpush1.bf16.msra.mxu0 0
    %1483 = vmatprep.subr.bf16.mxu0 0
    %1484 = vmatpush1.bf16.msra.mxu0 0
    %1485 = vmatprep.subr.bf16.mxu0 0
    %1486 = vmatpush1.bf16.msra.mxu0 0
    %1487 = vmatprep.subr.bf16.mxu0 0
    %1488 = vmatpush1.bf16.msra.mxu0 0
    %1489 = vmatprep.subr.bf16.mxu0 0
    %1490 = vmatpush1.bf16.msra.mxu0 0
    %1491 = vmatprep.subr.bf16.mxu0 0
    %1492 = vmatpush1.bf16.msra.mxu0 0
    %1493 = vmatprep.subr.bf16.mxu0 0
    %1494 = vmatpush1.bf16.msra.mxu0 0
    %1495 = vmatprep.subr.bf16.mxu0 0
    %1496 = vmatpush1.bf16.msra.mxu0 0
    %1497 = vmatprep.mubr.bf16.mxu0 0
    %1498 = vmatmul.mubr.bf16.gmra.mrb[0].mxu0 %v1463
    %v1499 = vpop.f32.mrb[0].mxu0
    %v1500 = vadd.f32 0.0, %v1499
    %v1501 = vpop.f32.mrb[0].mxu0
    %v1502 = vpop.f32.mrb[0].mxu0
    %v1503 = vpop.f32.mrb[0].mxu0
    %1504 = vdwg.mxu0
    %v1505 = vadd.f32 %v1457, %v1500
    %v1506 = vxor.u32 %v1505, 2147483648
    %v1507 = vmul.f32 %v1506, 1.442695
    %v1508 = vpow.pop %v1507
    %v1509 = vadd.f32 %v1508, 1.0
    %v1510 = vrcp.pop %v1509
    %v1511 = vmul.f32 1.0, %v1510
    %v1512 = vtanh.pop %v1505
    %v1513 = vmul.f32 %v1511, %v1365
    %1515 = vrot.lane.b32.xlu0 %v1512, 32
    %v1516 = vpop.permute.xlu0 %1515
    %v1518 = vmul.f32 %v1511, %v1516
    %1520 = vrot.lane.b32.xlu0 %v1518, 32
    %v1521 = vpop.permute.xlu0 %1520
    %v1523 = vadd.f32 %v1513, %v1521
    %v1524 = vtanh.pop %v1523
    %1526 = vrot.lane.b32.xlu0 %v1524, 32
    %v1527 = vpop.permute.xlu0 %1526
    %v1529 = vmul.f32 %v1511, %v1527
    %1531 = vrot.lane.b32.xlu0 %v1456, 64
    %v1532 = vpop.permute.xlu0 %1531
    %s1534 = scalar_lea.vmem %s7, 56
    %1535 = vst.msk [vmem:[%s1534] sm:$0xff] %vm245, %v1532
    %1537 = vrot.lane.b32.xlu0 %v1529, 64
    %v1538 = vpop.permute.xlu0 %1537
    %1540 = vst.msk [vmem:[#allocation3] sm:$0xff] %vm245, %v1538
    %v1541 = vld [vmem:[%s7] sm:$0xff]
    %v1542 = vld [vmem:[%s7 + $0x8] sm:$0xff]
    %v1543 = vld [vmem:[%s7 + $0x10] sm:$0xff]
    %v1544 = vld [vmem:[%s7 + $0x18] sm:$0xff]
    %v1545 = vld [vmem:[%s7 + $0x20] sm:$0xff]
    %v1546 = vld [vmem:[%s7 + $0x28] sm:$0xff]
    %v1547 = vld [vmem:[%s7 + $0x30] sm:$0xff]
    %v1548 = vld [vmem:[%s7 + $0x38] sm:$0xff]
    %v1549 = vld [vmem:[#allocation3] sm:$0xff]
    %v1550 = vld [vmem:[#allocation3 + $0x8] sm:$0xff]
    %v1551 = vld [vmem:[#allocation3 + $0x10] sm:$0xff]
    %v1552 = vld [vmem:[#allocation3 + $0x18] sm:$0xff]
    %v1553 = vld [vmem:[#allocation3 + $0x20] sm:$0xff]
    %v1554 = vld [vmem:[#allocation3 + $0x28] sm:$0xff]
    %v1555 = vld [vmem:[#allocation3 + $0x30] sm:$0xff]
    %v1556 = vld [vmem:[#allocation3 + $0x38] sm:$0xff]
    %v1557 = vadd.f32 %v1541, %v1549
    %v1558 = vadd.f32 %v1542, %v1550
    %v1559 = vadd.f32 %v1543, %v1551
    %v1560 = vadd.f32 %v1544, %v1552
    %v1561 = vadd.f32 %v1545, %v1553
    %v1562 = vadd.f32 %v1546, %v1554
    %v1563 = vadd.f32 %v1547, %v1555
    %v1564 = vadd.f32 %v1548, %v1556
    %1565 = vst.msk [vmem:[%s7] sm:$0xff] %vm245, %v1557
    %1566 = vst.msk [vmem:[%s7 + $0x8] sm:$0xff] %vm245, %v1558
    %1567 = vst.msk [vmem:[%s7 + $0x10] sm:$0xff] %vm245, %v1559
    %1568 = vst.msk [vmem:[%s7 + $0x18] sm:$0xff] %vm245, %v1560
    %1569 = vst.msk [vmem:[%s7 + $0x20] sm:$0xff] %vm245, %v1561
    %1570 = vst.msk [vmem:[%s7 + $0x28] sm:$0xff] %vm245, %v1562
    %1571 = vst.msk [vmem:[%s7 + $0x30] sm:$0xff] %vm245, %v1563
    %1572 = vst.msk [vmem:[%s7 + $0x38] sm:$0xff] %vm245, %v1564
    %1573 = vst.msk [vmem:[#allocation9] sm:$0xff] %vm245, %v1532
    %s1574 = scalar_lea.vmem [#allocation9], 8
    %1575 = vst.msk [vmem:[%s1574] sm:$0xff] %vm245, %v1538
    %1577 = vrot.lane.b32.xlu0 %v1450, 96
    %v1578 = vpop.permute.xlu0 %1577
    %1580 = vst.msk [vmem:[#allocation10] sm:$0xff] %vm245, %v1578
    %1582 = vrot.lane.b32.xlu0 %v1523, 96
    %v1583 = vpop.permute.xlu0 %1582
    %s1585 = scalar_lea.vmem [#allocation10], 8
    %1586 = vst.msk [vmem:[%s1585] sm:$0xff] %vm245, %v1583
    // Predicated region
    $region38: #{tpu_custom_call.1} parent=1 // pred_check
      _
    $region39: #{tpu_custom_call.1} parent=1 // pred_check_branch
      %1588 = sbr.rel (0) target = $region41
    $region40: #{tpu_custom_call.1} parent=1 // pred_region
      _
    $region41: #{tpu_custom_call.1} parent=1 // pred_fallthru
      _
    // Predicated region
    $region42: #{tpu_custom_call.1} parent=1 // pred_check
      _
    $region43: #{tpu_custom_call.1} parent=1 // pred_check_branch
      %1590 = sbr.rel (0) target = $region45
    $region44: #{tpu_custom_call.1} parent=1 // pred_region
      %s1592 = ssub.s32 256, 256
      %1593 = vsyncadd [#allocation6], %s1592
      %s1594 = sshll.u32 [#allocation9], 4
      %s1595 = int_to_ptr.vmem [resolvable:$true] %s1594
      %1600 = dma.vmem_to_hbm [thread:$0]  %s1595, 256, %s8, [#allocation6], 128, 128, 8
    $region45: #{tpu_custom_call.1} parent=1 // pred_fallthru
      _
    // Predicated region
    $region46: #{tpu_custom_call.1} parent=1 // pred_check
      _
    $region47: #{tpu_custom_call.1} parent=1 // pred_check_branch
      %1602 = sbr.rel (0) target = $region49
    $region48: #{tpu_custom_call.1} parent=1 // pred_region
      %s1604 = ssub.s32 256, 256
      %1605 = vsyncadd [#allocation11], %s1604
      %s1606 = sshll.u32 [#allocation10], 4
      %s1607 = int_to_ptr.vmem [resolvable:$true] %s1606
      %1612 = dma.vmem_to_hbm [thread:$0]  %s1607, 256, %s9, [#allocation11], 128, 128, 8
    $region49: #{tpu_custom_call.1} parent=1 // pred_fallthru
      _
    // Predicated region
    $region50: #{tpu_custom_call.1} parent=1 // pred_check
      _
    $region51: #{tpu_custom_call.1} parent=1 // pred_check_branch
      %1614 = sbr.rel (0) target = $region53
    $region52: #{tpu_custom_call.1} parent=1 // pred_region
      _
    $region53: #{tpu_custom_call.1} parent=1 // pred_fallthru
      _
    // Predicated region
    $region54: #{tpu_custom_call.1} parent=1 // pred_check
      _
    $region55: #{tpu_custom_call.1} parent=1 // pred_check_branch
      %1616 = sbr.rel (0) target = $region57
    $region56: #{tpu_custom_call.1} parent=1 // pred_region
      %1617 = dma.done [#allocation6], 256
    $region57: #{tpu_custom_call.1} parent=1 // pred_fallthru
      _
    // Predicated region
    $region58: #{tpu_custom_call.1} parent=1 // pred_check
      _
    $region59: #{tpu_custom_call.1} parent=1 // pred_check_branch
      %1619 = sbr.rel (0) target = $region61
    $region60: #{tpu_custom_call.1} parent=1 // pred_region
      %1620 = dma.done [#allocation11], 256
    $region61: #{tpu_custom_call.1} parent=1 // pred_fallthru
      _
    %1621 = vsyncpa [#allocation5], 1
    %1622 = vsyncpa [#allocation8], 1
    %1623 = vsyncpa [#allocation6], 1
    %1624 = vsyncpa [#allocation11], 1

</llo_original>
